<compile_context>
chip_gen: v7x
topology: tpu7x:2x2x1
jax: 0.10.0
libtpu: 0.0.40
codegen_flags: <defaults>
</compile_context>

<pallas_src>
import jax
import jax.numpy as jnp
from jax import lax
from jax.experimental import pallas as pl
from jax.experimental.pallas import tpu as pltpu

LANE = 128
SUBLANE = 8


def _round_up(a, b):
    return (a + b - 1) // b * b


def _choose_tn(num_nodes, max_tn=128, n_cores=2):
    # Even number of node tiles so dimension_semantics="parallel" splits evenly across
    # v7x's two TensorCores (review item 6); multiple of 8 for the sublane constraint.
    pairs = max(1, -(-num_nodes // (n_cores * max_tn)))
    tiles = n_cores * pairs
    tn = -(-num_nodes // tiles)
    return _round_up(max(tn, SUBLANE), SUBLANE)


def prepare_topology(edge_index, num_nodes, *, tn=None, te=1024):
    """Receiver-sort permutation + per-node-tile edge-block schedule.

    Depends only on the graph topology: hoist this out of the per-step path when
    edge_index is static across forward calls (review item 8).
    """
    te = _round_up(max(te, LANE), LANE)
    if tn is None:
        tn = _choose_tn(num_nodes)
    E = edge_index.shape[1]
    Np = _round_up(max(num_nodes, tn), tn)
    Ep = _round_up(max(E, 1), te)            # force >= 1 edge block even when E == 0
    n_node_tiles = Np // tn
    n_edge_blocks = Ep // te

    receivers = edge_index[1].astype(jnp.int32)
    order = jnp.argsort(receivers)                        # sort edges by receiver
    recv_sorted = receivers[order]
    # Sentinel Np never matches any (padded) node id -> padded edges never contribute.
    recv_p = jnp.pad(recv_sorted, (0, Ep - E), constant_values=Np)
    recv_2d = recv_p.reshape(1, Ep)                       # lane-dense [1, Ep]

    # Per node tile i (nodes [i*tn, (i+1)*tn)): contiguous sorted-edge range -> block range.
    tile_lo = jnp.arange(n_node_tiles, dtype=jnp.int32) * tn
    e_lo = jnp.searchsorted(recv_p, tile_lo, side="left")
    e_hi = jnp.searchsorted(recv_p, tile_lo + tn, side="left")
    kstart = jnp.clip(e_lo // te, 0, n_edge_blocks - 1).astype(jnp.int32)
    kend = jnp.clip((jnp.maximum(e_hi, 1) - 1) // te, 0, n_edge_blocks - 1)
    kcount = jnp.where(e_hi > e_lo, kend - kstart + 1, 0).astype(jnp.int32)

    return dict(order=order, recv_2d=recv_2d, kstart=kstart, kcount=kcount,
                tn=tn, te=te, Np=Np, Ep=Ep,
                n_node_tiles=n_node_tiles, n_edge_blocks=n_edge_blocks)


def node_block_kernel(kstart_ref, kcount_ref,                     # scalar prefetch (SMEM)
                      recv_ref, x_ref, ea_ref,                    # tiled inputs
                      w1x_ref, w1a_ref, b1_ref, w2_ref, b2_ref,   # VMEM-resident params
                      out_ref,                                    # tiled output
                      acc_ref):                                   # VMEM scratch [tn, De] f32
    del kstart_ref  # only used by the index_maps
    i = pl.program_id(0)               # node tile   (parallel across cores)
    k = pl.program_id(1)               # edge block  (reduction, innermost)
    last_k = pl.num_programs(1) - 1
    tn = acc_ref.shape[0]

    @pl.when(k == 0)
    def _init():
        acc_ref[...] = jnp.zeros_like(acc_ref)

    # Only edge blocks kstart[i] .. kstart[i]+kcount[i]-1 can hold receivers that land in
    # this node tile (edges are receiver-sorted); other steps are gated off and their DMA
    # is elided by the remapped index_map (repeated block index).
    @pl.when(k < kcount_ref[i])
    def _accumulate():
        # One-hot segment-sum on the MXU over RAW edge features:
        #   acc[n, :] += sum_e [recv[e] == i*tn + n] * edge_attr[e, :]
        # One-hot built without a [tn, te] int32 iota: [1, te] rel vs [tn, 1] sublane iota.
        rel = recv_ref[...] - i * tn                              # [1, te] int32
        row = lax.broadcasted_iota(jnp.int32, (tn, 1), 0)         # [tn, 1] int32
        onehot = (rel == row).astype(jnp.bfloat16)                # [tn, te] (0/1 exact)
        acc_ref[...] += jnp.dot(onehot, ea_ref[...],
                                preferred_element_type=jnp.float32)   # [tn, De] f32 acc

    @pl.when(k == last_k)
    def _epilogue():
        # W1 / ReLU / W2 applied once per node tile; bf16 MXU operands, f32 accumulation,
        # f32 biases.  Split W1 fuses the concat([x, agg]) away.
        agg = acc_ref[...].astype(jnp.bfloat16)
        h = (jnp.dot(x_ref[...], w1x_ref[...], preferred_element_type=jnp.float32)
             + jnp.dot(agg, w1a_ref[...], preferred_element_type=jnp.float32)
             + b1_ref[...])
        h = jnp.maximum(h, 0.0)                                   # ReLU
        out = (jnp.dot(h.astype(jnp.bfloat16), w2_ref[...],
                       preferred_element_type=jnp.float32)
               + b2_ref[...])
        out_ref[...] = out.astype(out_ref.dtype)                  # full-lane (unmasked) store


def node_block_forward(x, edge_attr, edge_index, params, *, tn=None, te=1024, topo=None):
    """Pallas NodeBlock forward. Returns a dict mimicking the torch_geometric Data."""
    N, Dx = x.shape
    E, De = edge_attr.shape
    w1, b1, w2, b2 = params["w1"], params["b1"], params["w2"], params["b2"]
    H = w1.shape[1]
    Do = w2.shape[1]

    if topo is None:
        topo = prepare_topology(edge_index, N, tn=tn, te=te)
    tn, te = topo["tn"], topo["te"]
    Np, Ep = topo["Np"], topo["Ep"]
    n_node_tiles, n_edge_blocks = topo["n_node_tiles"], topo["n_edge_blocks"]

    Hp = _round_up(H, LANE)
    Dop = _round_up(Do, LANE)

    # Per-call data prep: receiver-sorted / padded bf16 edge features, padded bf16 nodes.
    ea_p = jnp.pad(edge_attr[topo["order"]].astype(jnp.bfloat16), ((0, Ep - E), (0, 0)))
    x_p = jnp.pad(x, ((0, Np - N), (0, 0))).astype(jnp.bfloat16)

    # Resident weights (constant index maps): split W1, bf16 matmul operands, f32 biases.
    w1x = jnp.pad(w1[:Dx, :], ((0, 0), (0, Hp - H))).astype(jnp.bfloat16)
    w1a = jnp.pad(w1[Dx:, :], ((0, 0), (0, Hp - H))).astype(jnp.bfloat16)
    b1p = jnp.pad(b1, (0, Hp - H)).reshape(1, Hp).astype(jnp.float32)
    w2p = jnp.pad(w2, ((0, Hp - H), (0, Dop - Do))).astype(jnp.bfloat16)
    b2p = jnp.pad(b2, (0, Dop - Do)).reshape(1, Dop).astype(jnp.float32)

    def edge_block_idx(i, k, kstart_ref, kcount_ref):
        # Walk kstart[i] .. kstart[i]+kcount[i]-1, then repeat the last block so the
        # (useless) DMA is elided by the pipeliner.
        return kstart_ref[i] + jnp.minimum(k, jnp.maximum(kcount_ref[i], 1) - 1)

    out_padded = pl.pallas_call(
        node_block_kernel,
        out_shape=jax.ShapeDtypeStruct((Np, Dop), x.dtype),
        grid_spec=pltpu.PrefetchScalarGridSpec(
            num_scalar_prefetch=2,
            grid=(n_node_tiles, n_edge_blocks),
            in_specs=[
                pl.BlockSpec((1, te),                                   # receivers [1, Ep]
                             lambda i, k, ks, kc: (0, edge_block_idx(i, k, ks, kc))),
                pl.BlockSpec((tn, Dx), lambda i, k, *_: (i, 0)),        # x (bf16)
                pl.BlockSpec((te, De),                                  # edge_attr (bf16)
                             lambda i, k, ks, kc: (edge_block_idx(i, k, ks, kc), 0)),
                pl.BlockSpec((Dx, Hp), lambda i, k, *_: (0, 0)),        # W1 (x part)
                pl.BlockSpec((De, Hp), lambda i, k, *_: (0, 0)),        # W1 (agg part)
                pl.BlockSpec((1, Hp), lambda i, k, *_: (0, 0)),         # b1
                pl.BlockSpec((Hp, Dop), lambda i, k, *_: (0, 0)),       # W2
                pl.BlockSpec((1, Dop), lambda i, k, *_: (0, 0)),        # b2
            ],
            out_specs=pl.BlockSpec((tn, Dop), lambda i, k, *_: (i, 0)),
            scratch_shapes=[pltpu.VMEM((tn, De), jnp.float32)],         # raw-feature accumulator
        ),
        compiler_params=pltpu.CompilerParams(
            dimension_semantics=("parallel", "arbitrary"),
        ),
    )(topo["kstart"], topo["kcount"], topo["recv_2d"], x_p, ea_p,
      w1x, w1a, b1p, w2p, b2p)

    new_x = out_padded[:N, :Do]
    return {"x": new_x, "edge_attr": edge_attr, "edge_index": edge_index}


def _reference(x, edge_attr, edge_index, params):
    """Pure-JAX f32 reference for correctness checking."""
    N = x.shape[0]
    recv = edge_index[1]
    agg = jax.ops.segment_sum(edge_attr, recv, num_segments=N)
    collected = jnp.concatenate([x, agg], axis=-1)
    h = jnp.maximum(collected @ params["w1"] + params["b1"], 0.0)
    return h @ params["w2"] + params["b2"]


def _run_case(key, *, N, E, Dx, De, H, Do, tn=None, te=1024):
    k_x, k_e, k_idx, k_w1, k_b1, k_w2, k_b2 = jax.random.split(key, 7)
    x = jax.random.normal(k_x, (N, Dx), dtype=jnp.float32)
    edge_attr = jax.random.normal(k_e, (E, De), dtype=jnp.float32)
    if E > 0:
        edge_index = jax.random.randint(k_idx, (2, E), 0, N, dtype=jnp.int32)
    else:
        edge_index = jnp.zeros((2, 0), dtype=jnp.int32)
    params = {
        "w1": jax.random.normal(k_w1, (Dx + De, H), dtype=jnp.float32) * 0.1,
        "b1": jax.random.normal(k_b1, (H,), dtype=jnp.float32) * 0.1,
        "w2": jax.random.normal(k_w2, (H, Do), dtype=jnp.float32) * 0.1,
        "b2": jax.random.normal(k_b2, (Do,), dtype=jnp.float32) * 0.1,
    }

    out = node_block_forward(x, edge_attr, edge_index, params, tn=tn, te=te)
    jax.block_until_ready(out["x"])

    ref = _reference(x, edge_attr, edge_index, params)
    # bf16 MXU operands (edge_attr / one-hot / epilogue weights), f32 accumulation.
    max_err = float(jnp.max(jnp.abs(out["x"] - ref))) if ref.size else 0.0
    assert jnp.allclose(out["x"], ref, atol=2e-2, rtol=2e-2), \
        f"mismatch vs reference (max abs err {max_err})"
    assert out["edge_attr"].shape == (E, De)
    assert out["edge_index"].shape == (2, E)


if __name__ == "__main__":
    key = jax.random.PRNGKey(0)
    k1, k2, k3 = jax.random.split(key, 3)

    # Small case: 2 node tiles, single edge block.
    _run_case(k1, N=16, E=32, Dx=8, De=8, H=32, Do=8)
    # Larger case: 4 node tiles x 4 edge blocks — exercises the receiver-sorted schedule
    # (kstart/kcount), DMA-eliding remapped index_maps, gated edge blocks and padding.
    _run_case(k2, N=300, E=1000, Dx=8, De=8, H=32, Do=8, te=256)
    # E == 0: the forced single all-padding edge block still fires the epilogue.
    _run_case(k3, N=16, E=0, Dx=8, De=8, H=32, Do=8)

    print("KERNEL_OK")
</pallas_src>

<mosaic_0001>
module attributes {stable_mosaic.version = 11 : i64} {
  func.func @node_block_kernel(%arg0: i32, %arg1: i32, %arg2: memref<2xi32, #tpu.memory_space<smem>>, %arg3: memref<2xi32, #tpu.memory_space<smem>>, %arg4: memref<1x1024xi32, #tpu.memory_space<vmem>>, %arg5: memref<8x8xbf16, #tpu.memory_space<vmem>>, %arg6: memref<1024x8xbf16, #tpu.memory_space<vmem>>, %arg7: memref<8x128xbf16, #tpu.memory_space<vmem>>, %arg8: memref<8x128xbf16, #tpu.memory_space<vmem>>, %arg9: memref<1x128xf32, #tpu.memory_space<vmem>>, %arg10: memref<128x128xbf16, #tpu.memory_space<vmem>>, %arg11: memref<1x128xf32, #tpu.memory_space<vmem>>, %arg12: memref<8x128xf32, #tpu.memory_space<vmem>>, %arg13: memref<8x8xf32, #tpu.memory_space<vmem>>) attributes {dimension_semantics = [#tpu.dimension_semantics<parallel>, #tpu.dimension_semantics<arbitrary>], iteration_bounds = array<i64: 2, 1>, scalar_prefetch = 2 : i64, scratch_operands = 1 : i64, tpu.core_type = #tpu.core_type<tc>, window_params = [{transform_indices = @transform_0, window_bounds = array<i64: 1, 1024>}, {transform_indices = @transform_1, window_bounds = array<i64: 8, 8>}, {transform_indices = @transform_2, window_bounds = array<i64: 1024, 8>}, {pipeline_mode = #tpu.pipeline_mode<synchronous>, transform_indices = @transform_3, window_bounds = array<i64: 8, 128>}, {pipeline_mode = #tpu.pipeline_mode<synchronous>, transform_indices = @transform_4, window_bounds = array<i64: 8, 128>}, {pipeline_mode = #tpu.pipeline_mode<synchronous>, transform_indices = @transform_5, window_bounds = array<i64: 1, 128>}, {pipeline_mode = #tpu.pipeline_mode<synchronous>, transform_indices = @transform_6, window_bounds = array<i64: 128, 128>}, {pipeline_mode = #tpu.pipeline_mode<synchronous>, transform_indices = @transform_7, window_bounds = array<i64: 1, 128>}, {transform_indices = @transform_8, window_bounds = array<i64: 8, 128>}]} {
    %c0_i32 = arith.constant 0 : i32
    %0 = arith.cmpi eq, %arg1, %c0_i32 : i32
    %1 = arith.extui %0 : i1 to i32
    %c0_i32_0 = arith.constant 0 : i32
    %2 = arith.cmpi ne, %1, %c0_i32_0 : i32
    scf.if %2 {
      %cst = arith.constant 0.000000e+00 : f32
      %11 = vector.broadcast %cst : f32 to vector<8x8xf32>
      %c0 = arith.constant 0 : index
      %c0_4 = arith.constant 0 : index
      %12 = vector.load %arg13[%c0, %c0_4] : memref<8x8xf32, #tpu.memory_space<vmem>>, vector<8x8xf32>
      tpu.vector_store %arg13[%c0, %c0_4], %11 {strides = array<i32>} : memref<8x8xf32, #tpu.memory_space<vmem>>, vector<8x8xf32>,
    } else {
    }
    %3 = arith.index_cast %arg0 : i32 to index
    %4 = memref.load %arg3[%3] : memref<2xi32, #tpu.memory_space<smem>>
    %5 = arith.cmpi slt, %arg1, %4 : i32
    %6 = arith.extui %5 : i1 to i32
    %c0_i32_1 = arith.constant 0 : i32
    %7 = arith.cmpi ne, %6, %c0_i32_1 : i32
    scf.if %7 {
      %c0 = arith.constant 0 : index
      %c0_4 = arith.constant 0 : index
      %11 = vector.load %arg4[%c0, %c0_4] : memref<1x1024xi32, #tpu.memory_space<vmem>>, vector<1x1024xi32>
      %c8_i32 = arith.constant 8 : i32
      %12 = arith.muli %arg0, %c8_i32 : i32
      %13 = vector.broadcast %12 : i32 to vector<1x1024xi32>
      %14 = arith.subi %11, %13 : vector<1x1024xi32>
      %15 = tpu.iota {dimensions = array<i32: 0>} : vector<8x1xi32>
      %16 = vector.broadcast %14 : vector<1x1024xi32> to vector<8x1024xi32>
      %17 = vector.broadcast %15 : vector<8x1xi32> to vector<8x1024xi32>
      %18 = arith.cmpi eq, %16, %17 : vector<8x1024xi32>
      %19 = arith.extui %18 : vector<8x1024xi1> to vector<8x1024xi32>
      %20 = arith.sitofp %19 : vector<8x1024xi32> to vector<8x1024xf32>
      %21 = arith.truncf %20 : vector<8x1024xf32> to vector<8x1024xbf16>
      %c0_5 = arith.constant 0 : index
      %c0_6 = arith.constant 0 : index
      %22 = vector.load %arg13[%c0_5, %c0_6] : memref<8x8xf32, #tpu.memory_space<vmem>>, vector<8x8xf32>
      %c0_7 = arith.constant 0 : index
      %c0_8 = arith.constant 0 : index
      %23 = vector.load %arg6[%c0_7, %c0_8] : memref<1024x8xbf16, #tpu.memory_space<vmem>>, vector<1024x8xbf16>
      %cst = arith.constant dense<0.000000e+00> : vector<8x8xf32>
      %24 = tpu.matmul %21, %23, %cst {dimension_numbers = #tpu.dot_dimension_numbers<[1], [0], [0], [1], [0, 0, 1, 1], [], []>} : vector<8x1024xbf16>, vector<1024x8xbf16>, vector<8x8xf32> -> vector<8x8xf32>
      %25 = arith.addf %22, %24 : vector<8x8xf32>
      %c0_9 = arith.constant 0 : index
      %c0_10 = arith.constant 0 : index
      %26 = vector.load %arg13[%c0_9, %c0_10] : memref<8x8xf32, #tpu.memory_space<vmem>>, vector<8x8xf32>
      tpu.vector_store %arg13[%c0_9, %c0_10], %25 {strides = array<i32>} : memref<8x8xf32, #tpu.memory_space<vmem>>, vector<8x8xf32>,
    } else {
    }
    %c0_i32_2 = arith.constant 0 : i32
    %8 = arith.cmpi eq, %arg1, %c0_i32_2 : i32
    %9 = arith.extui %8 : i1 to i32
    %c0_i32_3 = arith.constant 0 : i32
    %10 = arith.cmpi ne, %9, %c0_i32_3 : i32
    scf.if %10 {
      %c0 = arith.constant 0 : index
      %c0_4 = arith.constant 0 : index
      %11 = vector.load %arg13[%c0, %c0_4] : memref<8x8xf32, #tpu.memory_space<vmem>>, vector<8x8xf32>
      %12 = arith.truncf %11 : vector<8x8xf32> to vector<8x8xbf16>
      %c0_5 = arith.constant 0 : index
      %c0_6 = arith.constant 0 : index
      %13 = vector.load %arg5[%c0_5, %c0_6] : memref<8x8xbf16, #tpu.memory_space<vmem>>, vector<8x8xbf16>
      %c0_7 = arith.constant 0 : index
      %c0_8 = arith.constant 0 : index
      %14 = vector.load %arg7[%c0_7, %c0_8] : memref<8x128xbf16, #tpu.memory_space<vmem>>, vector<8x128xbf16>
      %cst = arith.constant dense<0.000000e+00> : vector<8x128xf32>
      %15 = tpu.matmul %13, %14, %cst {dimension_numbers = #tpu.dot_dimension_numbers<[1], [0], [0], [1], [0, 0, 1, 1], [], []>} : vector<8x8xbf16>, vector<8x128xbf16>, vector<8x128xf32> -> vector<8x128xf32>
      %c0_9 = arith.constant 0 : index
      %c0_10 = arith.constant 0 : index
      %16 = vector.load %arg8[%c0_9, %c0_10] : memref<8x128xbf16, #tpu.memory_space<vmem>>, vector<8x128xbf16>
      %cst_11 = arith.constant dense<0.000000e+00> : vector<8x128xf32>
      %17 = tpu.matmul %12, %16, %cst_11 {dimension_numbers = #tpu.dot_dimension_numbers<[1], [0], [0], [1], [0, 0, 1, 1], [], []>} : vector<8x8xbf16>, vector<8x128xbf16>, vector<8x128xf32> -> vector<8x128xf32>
      %18 = arith.addf %15, %17 : vector<8x128xf32>
      %c0_12 = arith.constant 0 : index
      %c0_13 = arith.constant 0 : index
      %19 = vector.load %arg9[%c0_12, %c0_13] : memref<1x128xf32, #tpu.memory_space<vmem>>, vector<1x128xf32>
      %20 = vector.broadcast %19 : vector<1x128xf32> to vector<8x128xf32>
      %21 = arith.addf %18, %20 : vector<8x128xf32>
      %cst_14 = arith.constant 0.000000e+00 : f32
      %22 = vector.broadcast %cst_14 : f32 to vector<8x128xf32>
      %23 = arith.maximumf %21, %22 : vector<8x128xf32>
      %24 = arith.truncf %23 : vector<8x128xf32> to vector<8x128xbf16>
      %c0_15 = arith.constant 0 : index
      %c0_16 = arith.constant 0 : index
      %25 = vector.load %arg10[%c0_15, %c0_16] : memref<128x128xbf16, #tpu.memory_space<vmem>>, vector<128x128xbf16>
      %cst_17 = arith.constant dense<0.000000e+00> : vector<8x128xf32>
      %26 = tpu.matmul %24, %25, %cst_17 {dimension_numbers = #tpu.dot_dimension_numbers<[1], [0], [0], [1], [0, 0, 1, 1], [], []>} : vector<8x128xbf16>, vector<128x128xbf16>, vector<8x128xf32> -> vector<8x128xf32>
      %c0_18 = arith.constant 0 : index
      %c0_19 = arith.constant 0 : index
      %27 = vector.load %arg11[%c0_18, %c0_19] : memref<1x128xf32, #tpu.memory_space<vmem>>, vector<1x128xf32>
      %28 = vector.broadcast %27 : vector<1x128xf32> to vector<8x128xf32>
      %29 = arith.addf %26, %28 : vector<8x128xf32>
      %c0_20 = arith.constant 0 : index
      %c0_21 = arith.constant 0 : index
      %30 = vector.load %arg12[%c0_20, %c0_21] : memref<8x128xf32, #tpu.memory_space<vmem>>, vector<8x128xf32>
      tpu.vector_store %arg12[%c0_20, %c0_21], %29 {strides = array<i32>} : memref<8x128xf32, #tpu.memory_space<vmem>>, vector<8x128xf32>,
    } else {
    }
    return
  }
  func.func @transform_0(%arg0: i32, %arg1: i32, %arg2: memref<2xi32, #tpu.memory_space<smem>>, %arg3: memref<2xi32, #tpu.memory_space<smem>>) -> (i32, i32) {
    %0 = arith.index_cast %arg0 : i32 to index
    %1 = memref.load %arg2[%0] : memref<2xi32, #tpu.memory_space<smem>>
    %2 = arith.index_cast %arg0 : i32 to index
    %3 = memref.load %arg3[%2] : memref<2xi32, #tpu.memory_space<smem>>
    %c1_i32 = arith.constant 1 : i32
    %4 = arith.maxsi %3, %c1_i32 : i32
    %c1_i32_0 = arith.constant 1 : i32
    %5 = arith.subi %4, %c1_i32_0 : i32
    %6 = arith.minsi %arg1, %5 : i32
    %7 = arith.addi %1, %6 : i32
    %c0_i32 = arith.constant 0 : i32
    %c0_i32_1 = arith.constant 0 : i32
    return %c0_i32, %7 : i32, i32
  }
  func.func @transform_1(%arg0: i32, %arg1: i32, %arg2: memref<2xi32, #tpu.memory_space<smem>>, %arg3: memref<2xi32, #tpu.memory_space<smem>>) -> (i32, i32) {
    %c0_i32 = arith.constant 0 : i32
    %c0_i32_0 = arith.constant 0 : i32
    return %arg0, %c0_i32 : i32, i32
  }
  func.func @transform_2(%arg0: i32, %arg1: i32, %arg2: memref<2xi32, #tpu.memory_space<smem>>, %arg3: memref<2xi32, #tpu.memory_space<smem>>) -> (i32, i32) {
    %0 = arith.index_cast %arg0 : i32 to index
    %1 = memref.load %arg2[%0] : memref<2xi32, #tpu.memory_space<smem>>
    %2 = arith.index_cast %arg0 : i32 to index
    %3 = memref.load %arg3[%2] : memref<2xi32, #tpu.memory_space<smem>>
    %c1_i32 = arith.constant 1 : i32
    %4 = arith.maxsi %3, %c1_i32 : i32
    %c1_i32_0 = arith.constant 1 : i32
    %5 = arith.subi %4, %c1_i32_0 : i32
    %6 = arith.minsi %arg1, %5 : i32
    %7 = arith.addi %1, %6 : i32
    %c0_i32 = arith.constant 0 : i32
    %c0_i32_1 = arith.constant 0 : i32
    return %7, %c0_i32 : i32, i32
  }
  func.func @transform_3(%arg0: i32, %arg1: i32, %arg2: memref<2xi32, #tpu.memory_space<smem>>, %arg3: memref<2xi32, #tpu.memory_space<smem>>) -> (i32, i32) {
    %c0_i32 = arith.constant 0 : i32
    %c0_i32_0 = arith.constant 0 : i32
    %c0_i32_1 = arith.constant 0 : i32
    return %c0_i32, %c0_i32_0 : i32, i32
  }
  func.func @transform_4(%arg0: i32, %arg1: i32, %arg2: memref<2xi32, #tpu.memory_space<smem>>, %arg3: memref<2xi32, #tpu.memory_space<smem>>) -> (i32, i32) {
    %c0_i32 = arith.constant 0 : i32
    %c0_i32_0 = arith.constant 0 : i32
    %c0_i32_1 = arith.constant 0 : i32
    return %c0_i32, %c0_i32_0 : i32, i32
  }
  func.func @transform_5(%arg0: i32, %arg1: i32, %arg2: memref<2xi32, #tpu.memory_space<smem>>, %arg3: memref<2xi32, #tpu.memory_space<smem>>) -> (i32, i32) {
    %c0_i32 = arith.constant 0 : i32
    %c0_i32_0 = arith.constant 0 : i32
    %c0_i32_1 = arith.constant 0 : i32
    return %c0_i32, %c0_i32_0 : i32, i32
  }
  func.func @transform_6(%arg0: i32, %arg1: i32, %arg2: memref<2xi32, #tpu.memory_space<smem>>, %arg3: memref<2xi32, #tpu.memory_space<smem>>) -> (i32, i32) {
    %c0_i32 = arith.constant 0 : i32
    %c0_i32_0 = arith.constant 0 : i32
    %c0_i32_1 = arith.constant 0 : i32
    return %c0_i32, %c0_i32_0 : i32, i32
  }
  func.func @transform_7(%arg0: i32, %arg1: i32, %arg2: memref<2xi32, #tpu.memory_space<smem>>, %arg3: memref<2xi32, #tpu.memory_space<smem>>) -> (i32, i32) {
    %c0_i32 = arith.constant 0 : i32
    %c0_i32_0 = arith.constant 0 : i32
    %c0_i32_1 = arith.constant 0 : i32
    return %c0_i32, %c0_i32_0 : i32, i32
  }
  func.func @transform_8(%arg0: i32, %arg1: i32, %arg2: memref<2xi32, #tpu.memory_space<smem>>, %arg3: memref<2xi32, #tpu.memory_space<smem>>) -> (i32, i32) {
    %c0_i32 = arith.constant 0 : i32
    %c0_i32_0 = arith.constant 0 : i32
    return %arg0, %c0_i32 : i32, i32
  }
}

</mosaic_0001>

<llo_original>
// kernel: tpu_custom_call.1
$region0: #{tpu_custom_call.1}
  #allocation0 [shape = 'u32[]', space=smem, size = 0x4, offset = 0x4, fixed_abs, tag = 'smem constant byte address 0x4 - core index']
  #allocation1 [shape = 'u32[144,128]{1,0:T(1,128)}', space=vmem, size = 0x12000, scoped, tag = 'internal scratch']
  #allocation2 [shape = 'f32[8,8]{1,0:T(8,128)}', space=vmem, size = 0x1000, scoped, tag = 'scratch operand']
  #allocation3 [shape = 's32[1]{0}', space=sflag, size = 0x4, scoped, tag = 'scoped memory for tpu_custom_call.1']
  #allocation4 [shape = 'u8[512]{0}', space=smem, size = 0x200, scoped, tag = 'prefetched SMEM operand 0']
  #allocation5 [shape = 'u8[512]{0}', space=smem, size = 0x200, scoped, tag = 'prefetched SMEM operand 1']
  %s0 = inlined_call_operand.vmem [shape: s32[2], index: 0, kind: input, shape index: {}]
  %s1 = inlined_call_operand.vmem [shape: s32[2], index: 1, kind: input, shape index: {}]
  %s2 = inlined_call_operand.vmem [shape: s32[1,1024], index: 2, kind: input, shape index: {}]
  %s3 = inlined_call_operand.vmem [shape: bf16[16,8], index: 3, kind: input, shape index: {}]
  %s4 = inlined_call_operand.vmem [shape: bf16[1024,8], index: 4, kind: input, shape index: {}]
  %s5 = inlined_call_operand.vmem [shape: bf16[8,128], index: 5, kind: input, shape index: {}]
  %s6 = inlined_call_operand.vmem [shape: bf16[8,128], index: 6, kind: input, shape index: {}]
  %s7 = inlined_call_operand.vmem [shape: f32[1,128], index: 7, kind: input, shape index: {}]
  %s8 = inlined_call_operand.vmem [shape: bf16[128,128], index: 8, kind: input, shape index: {}]
  %s9 = inlined_call_operand.vmem [shape: f32[1,128], index: 9, kind: input, shape index: {}]
  %s10 = inlined_call_operand.hbm [shape: f32[16,128], index: 10, kind: output, shape index: {}]
  %s11 = sld [smem:[#allocation0]]
  $region77: #{tpu_custom_call.1} parent=0
    _
  %s13 = ssub.s32 1, %s11
  %s14 = scalar_select 0, %s13, %s11
  %s15 = sshll.u32 %s0, 4
  %s16 = int_to_ptr.vmem [resolvable:$true] %s15
  %18 = dma.vmem_to_smem %s16, 16, [#allocation4], [#allocation3]
  %s19 = sshll.u32 %s1, 4
  %s20 = int_to_ptr.vmem [resolvable:$true] %s19
  %22 = dma.vmem_to_smem %s20, 16, [#allocation5], [#allocation3]
  %23 = dma.done [#allocation3], 32
  %24 = sfence
  $region1: #{tpu_custom_call.1} parent=0
    #allocation6 [shape = 'u8[8192]{0}', space=vmem, size = 0x2000, scoped, tag = 'output window, operand 0']
    #allocation7 [shape = 's32[2]{0}', space=sflag, size = 0x8, scoped, tag = 'scoped memory for tpu_custom_call.1']
    %25 = vsyncpa [#allocation7], 0
    %s26 = scalar_lea.sflag [#allocation7], 1
    %27 = vsyncpa %s26, 0
    loop: start=0, step=1, limit=4
    $region2: #{tpu_custom_call.1} parent=1 // loop_pre_header
      _
    $region3: #{tpu_custom_call.1} parent=1 // loop_header
      %s29 = sphi 0, %s33
      %p30 = scmp.ge.s32.totalorder %s29, 4
      %s36 = sphi 0, %s48
      %s37 = sphi 0, %s44
      %s38 = sphi 0, %s36
      %s39 = sphi 0, %s37
      %s40 = sphi 0, %s38
      %s41 = sphi 0, %s39
      %s67 = sphi 0, %s69
      %s70 = sphi 0, %s67
      %s71 = sphi 0, %s70
      %s87 = sphi 0, %s71
      %s93 = sphi 0, %s95
      %s96 = sphi 0, %s93
      %s97 = sphi 0, %s96
      %s113 = sphi 0, %s97
      %s135 = sphi 0, %s137
      %s138 = sphi 0, %s135
      %s139 = sphi 0, %s138
      %s155 = sphi 0, %s139
      %s159 = sphi 0, %s159
      %s161 = sphi 0, %s159
      %s162 = sphi 0, %s161
      %s176 = sphi 0, %s162
      %s180 = sphi 0, %s180
      %s182 = sphi 0, %s180
      %s183 = sphi 0, %s182
      %s197 = sphi 0, %s183
      %s201 = sphi 0, %s201
      %s203 = sphi 0, %s201
      %s204 = sphi 0, %s203
      %s218 = sphi 0, %s204
      %s222 = sphi 0, %s222
      %s224 = sphi 0, %s222
      %s225 = sphi 0, %s224
      %s239 = sphi 0, %s225
      %s243 = sphi 0, %s243
      %s245 = sphi 0, %s243
      %s246 = sphi 0, %s245
      %s260 = sphi 0, %s246
      %s266 = sphi 0, %s268
      %s269 = sphi 0, %s266
      %s270 = sphi 0, %s269
      %s286 = sphi 0, %s270
    $region4: #{tpu_custom_call.1} parent=1 // loop_header_branch
      %32 = sbr.rel (%p30) target = $region8
    $region5: #{tpu_custom_call.1} parent=1 // loop_body
      %s34 = ssub.s32 %s29, 1
      %s35 = ssub.s32 %s29, 2
      %s42 = sadd.s32 1, %s37
      %p43 = scmp.ge.s32.totalorder %s42, 1
      %s44 = scalar_select %p43, 0, %s42
      %s45 = sadd.s32 1, %s36
      %s46 = scalar_select %p43, %s45, %s36
      %p47 = scmp.ge.s32.totalorder %s46, 2
      %s48 = scalar_select %p47, 0, %s46
      %s49 = sld [smem:[#allocation4 + %s36]]
      %s50 = sld [smem:[#allocation5 + %s36]]
      %p51 = scmp.gt.s32.totalorder %s50, 1
      %s52 = scalar_select %p51, %s50, 1
      %s53 = ssub.s32 %s52, 1
      %p54 = scmp.lt.s32.totalorder %s37, %s53
      %s55 = scalar_select %p54, %s37, %s53
      %s56 = sadd.s32 %s49, %s55
      %s57 = sld [smem:[#allocation4 + %s48]]
      %s58 = sld [smem:[#allocation5 + %s48]]
      %p59 = scmp.gt.s32.totalorder %s58, 1
      %s60 = scalar_select %p59, %s58, 1
      %s61 = ssub.s32 %s60, 1
      %p62 = scmp.lt.s32.totalorder %s44, %s61
      %s63 = scalar_select %p62, %s44, %s61
      %s64 = sadd.s32 %s57, %s63
      %s65 = ssub.s32 %s56, %s64
      %p66 = scmp.eq.s32.totalorder %s65, 0
      %s68 = sadd.s32 %s67, 1
      %s69 = scalar_select %p66, %s67, %s68
      %p72 = pneg %p66
      %p73 = scmp.eq.s32.totalorder %s29, 1
      %p74 = por %p72, %p73
      %p75 = scmp.ne.s32.totalorder %s67, %s70
      %p76 = scmp.eq.s32.totalorder %s29, 0
      %p77 = por %p75, %p76
      %p78 = scmp.ne.s32.totalorder %s67, %s70
      %p79 = scmp.eq.s32.totalorder %s34, 1
      %p80 = por %p78, %p79
      %p81 = scmp.ne.s32.totalorder %s70, %s71
      %p82 = scmp.eq.s32.totalorder %s34, 0
      %p83 = por %p81, %p82
      %p84 = scmp.ne.s32.totalorder %s70, %s71
      %p85 = scmp.eq.s32.totalorder %s35, 1
      %p86 = por %p84, %p85
      %p88 = scmp.ne.s32.totalorder %s71, %s87
      %p89 = scmp.eq.s32.totalorder %s35, 0
      %p90 = por %p88, %p89
      %s91 = ssub.s32 %s36, %s48
      %p92 = scmp.eq.s32.totalorder %s91, 0
      %s94 = sadd.s32 %s93, 1
      %s95 = scalar_select %p92, %s93, %s94
      %p98 = pneg %p92
      %p99 = scmp.eq.s32.totalorder %s29, 1
      %p100 = por %p98, %p99
      %p101 = scmp.ne.s32.totalorder %s93, %s96
      %p102 = scmp.eq.s32.totalorder %s29, 0
      %p103 = por %p101, %p102
      %p104 = scmp.ne.s32.totalorder %s93, %s96
      %p105 = scmp.eq.s32.totalorder %s34, 1
      %p106 = por %p104, %p105
      %p107 = scmp.ne.s32.totalorder %s96, %s97
      %p108 = scmp.eq.s32.totalorder %s34, 0
      %p109 = por %p107, %p108
      %p110 = scmp.ne.s32.totalorder %s96, %s97
      %p111 = scmp.eq.s32.totalorder %s35, 1
      %p112 = por %p110, %p111
      %p114 = scmp.ne.s32.totalorder %s97, %s113
      %p115 = scmp.eq.s32.totalorder %s35, 0
      %p116 = por %p114, %p115
      %s117 = sld [smem:[#allocation4 + %s36]]
      %s118 = sld [smem:[#allocation5 + %s36]]
      %p119 = scmp.gt.s32.totalorder %s118, 1
      %s120 = scalar_select %p119, %s118, 1
      %s121 = ssub.s32 %s120, 1
      %p122 = scmp.lt.s32.totalorder %s37, %s121
      %s123 = scalar_select %p122, %s37, %s121
      %s124 = sadd.s32 %s117, %s123
      %s125 = sld [smem:[#allocation4 + %s48]]
      %s126 = sld [smem:[#allocation5 + %s48]]
      %p127 = scmp.gt.s32.totalorder %s126, 1
      %s128 = scalar_select %p127, %s126, 1
      %s129 = ssub.s32 %s128, 1
      %p130 = scmp.lt.s32.totalorder %s44, %s129
      %s131 = scalar_select %p130, %s44, %s129
      %s132 = sadd.s32 %s125, %s131
      %s133 = ssub.s32 %s124, %s132
      %p134 = scmp.eq.s32.totalorder %s133, 0
      %s136 = sadd.s32 %s135, 1
      %s137 = scalar_select %p134, %s135, %s136
      %p140 = pneg %p134
      %p141 = scmp.eq.s32.totalorder %s29, 1
      %p142 = por %p140, %p141
      %p143 = scmp.ne.s32.totalorder %s135, %s138
      %p144 = scmp.eq.s32.totalorder %s29, 0
      %p145 = por %p143, %p144
      %p146 = scmp.ne.s32.totalorder %s135, %s138
      %p147 = scmp.eq.s32.totalorder %s34, 1
      %p148 = por %p146, %p147
      %p149 = scmp.ne.s32.totalorder %s138, %s139
      %p150 = scmp.eq.s32.totalorder %s34, 0
      %p151 = por %p149, %p150
      %p152 = scmp.ne.s32.totalorder %s138, %s139
      %p153 = scmp.eq.s32.totalorder %s35, 1
      %p154 = por %p152, %p153
      %p156 = scmp.ne.s32.totalorder %s139, %s155
      %p157 = scmp.eq.s32.totalorder %s35, 0
      %p158 = por %p156, %p157
      %s160 = sadd.s32 %s159, 1
      %p163 = scmp.eq.s32.totalorder %s29, 1
      %p164 = scmp.ne.s32.totalorder %s159, %s161
      %p165 = scmp.eq.s32.totalorder %s29, 0
      %p166 = por %p164, %p165
      %p167 = scmp.ne.s32.totalorder %s159, %s161
      %p168 = scmp.eq.s32.totalorder %s34, 1
      %p169 = por %p167, %p168
      %p170 = scmp.ne.s32.totalorder %s161, %s162
      %p171 = scmp.eq.s32.totalorder %s34, 0
      %p172 = por %p170, %p171
      %p173 = scmp.ne.s32.totalorder %s161, %s162
      %p174 = scmp.eq.s32.totalorder %s35, 1
      %p175 = por %p173, %p174
      %p177 = scmp.ne.s32.totalorder %s162, %s176
      %p178 = scmp.eq.s32.totalorder %s35, 0
      %p179 = por %p177, %p178
      %s181 = sadd.s32 %s180, 1
      %p184 = scmp.eq.s32.totalorder %s29, 1
      %p185 = scmp.ne.s32.totalorder %s180, %s182
      %p186 = scmp.eq.s32.totalorder %s29, 0
      %p187 = por %p185, %p186
      %p188 = scmp.ne.s32.totalorder %s180, %s182
      %p189 = scmp.eq.s32.totalorder %s34, 1
      %p190 = por %p188, %p189
      %p191 = scmp.ne.s32.totalorder %s182, %s183
      %p192 = scmp.eq.s32.totalorder %s34, 0
      %p193 = por %p191, %p192
      %p194 = scmp.ne.s32.totalorder %s182, %s183
      %p195 = scmp.eq.s32.totalorder %s35, 1
      %p196 = por %p194, %p195
      %p198 = scmp.ne.s32.totalorder %s183, %s197
      %p199 = scmp.eq.s32.totalorder %s35, 0
      %p200 = por %p198, %p199
      %s202 = sadd.s32 %s201, 1
      %p205 = scmp.eq.s32.totalorder %s29, 1
      %p206 = scmp.ne.s32.totalorder %s201, %s203
      %p207 = scmp.eq.s32.totalorder %s29, 0
      %p208 = por %p206, %p207
      %p209 = scmp.ne.s32.totalorder %s201, %s203
      %p210 = scmp.eq.s32.totalorder %s34, 1
      %p211 = por %p209, %p210
      %p212 = scmp.ne.s32.totalorder %s203, %s204
      %p213 = scmp.eq.s32.totalorder %s34, 0
      %p214 = por %p212, %p213
      %p215 = scmp.ne.s32.totalorder %s203, %s204
      %p216 = scmp.eq.s32.totalorder %s35, 1
      %p217 = por %p215, %p216
      %p219 = scmp.ne.s32.totalorder %s204, %s218
      %p220 = scmp.eq.s32.totalorder %s35, 0
      %p221 = por %p219, %p220
      %s223 = sadd.s32 %s222, 1
      %p226 = scmp.eq.s32.totalorder %s29, 1
      %p227 = scmp.ne.s32.totalorder %s222, %s224
      %p228 = scmp.eq.s32.totalorder %s29, 0
      %p229 = por %p227, %p228
      %p230 = scmp.ne.s32.totalorder %s222, %s224
      %p231 = scmp.eq.s32.totalorder %s34, 1
      %p232 = por %p230, %p231
      %p233 = scmp.ne.s32.totalorder %s224, %s225
      %p234 = scmp.eq.s32.totalorder %s34, 0
      %p235 = por %p233, %p234
      %p236 = scmp.ne.s32.totalorder %s224, %s225
      %p237 = scmp.eq.s32.totalorder %s35, 1
      %p238 = por %p236, %p237
      %p240 = scmp.ne.s32.totalorder %s225, %s239
      %p241 = scmp.eq.s32.totalorder %s35, 0
      %p242 = por %p240, %p241
      %s244 = sadd.s32 %s243, 1
      %p247 = scmp.eq.s32.totalorder %s29, 1
      %p248 = scmp.ne.s32.totalorder %s243, %s245
      %p249 = scmp.eq.s32.totalorder %s29, 0
      %p250 = por %p248, %p249
      %p251 = scmp.ne.s32.totalorder %s243, %s245
      %p252 = scmp.eq.s32.totalorder %s34, 1
      %p253 = por %p251, %p252
      %p254 = scmp.ne.s32.totalorder %s245, %s246
      %p255 = scmp.eq.s32.totalorder %s34, 0
      %p256 = por %p254, %p255
      %p257 = scmp.ne.s32.totalorder %s245, %s246
      %p258 = scmp.eq.s32.totalorder %s35, 1
      %p259 = por %p257, %p258
      %p261 = scmp.ne.s32.totalorder %s246, %s260
      %p262 = scmp.eq.s32.totalorder %s35, 0
      %p263 = por %p261, %p262
      %s264 = ssub.s32 %s36, %s48
      %p265 = scmp.eq.s32.totalorder %s264, 0
      %s267 = sadd.s32 %s266, 1
      %s268 = scalar_select %p265, %s266, %s267
      %p271 = pneg %p265
      %p272 = scmp.eq.s32.totalorder %s29, 1
      %p273 = por %p271, %p272
      %p274 = scmp.ne.s32.totalorder %s266, %s269
      %p275 = scmp.eq.s32.totalorder %s29, 0
      %p276 = por %p274, %p275
      %p277 = scmp.ne.s32.totalorder %s266, %s269
      %p278 = scmp.eq.s32.totalorder %s34, 1
      %p279 = por %p277, %p278
      %p280 = scmp.ne.s32.totalorder %s269, %s270
      %p281 = scmp.eq.s32.totalorder %s34, 0
      %p282 = por %p280, %p281
      %p283 = scmp.ne.s32.totalorder %s269, %s270
      %p284 = scmp.eq.s32.totalorder %s35, 1
      %p285 = por %p283, %p284
      %p287 = scmp.ne.s32.totalorder %s270, %s286
      %p288 = scmp.eq.s32.totalorder %s35, 0
      %p289 = por %p287, %p288
      %p290 = scmp.le.s32.totalorder 1, %s29
      %p291 = scmp.lt.s32.totalorder %s29, 3
      %p292 = pnand %p290, %p291
      %p293 = pneg %p292
      // Predicated region
      $region9: #{tpu_custom_call.1} parent=5 // pred_check
        _
      $region10: #{tpu_custom_call.1} parent=5 // pred_check_branch
        %295 = sbr.rel (%p292) target = $region12
      $region11: #{tpu_custom_call.1} parent=5 // pred_region
        %s296 = ssub.s32 %s29, 1
        // Predicated region
        $region13: #{tpu_custom_call.1} parent=11 // pred_check
          %p297 = pneg %p172
        $region14: #{tpu_custom_call.1} parent=11 // pred_check_branch
          %299 = sbr.rel (%p297) target = $region16
        $region15: #{tpu_custom_call.1} parent=11 // pred_region
          _
        $region16: #{tpu_custom_call.1} parent=11 // pred_fallthru
          _
        // Predicated region
        $region17: #{tpu_custom_call.1} parent=11 // pred_check
          %p300 = pneg %p193
        $region18: #{tpu_custom_call.1} parent=11 // pred_check_branch
          %302 = sbr.rel (%p300) target = $region20
        $region19: #{tpu_custom_call.1} parent=11 // pred_region
          _
        $region20: #{tpu_custom_call.1} parent=11 // pred_fallthru
          _
        // Predicated region
        $region21: #{tpu_custom_call.1} parent=11 // pred_check
          %p303 = pneg %p214
        $region22: #{tpu_custom_call.1} parent=11 // pred_check_branch
          %305 = sbr.rel (%p303) target = $region24
        $region23: #{tpu_custom_call.1} parent=11 // pred_region
          _
        $region24: #{tpu_custom_call.1} parent=11 // pred_fallthru
          _
        // Predicated region
        $region25: #{tpu_custom_call.1} parent=11 // pred_check
          %p306 = pneg %p235
        $region26: #{tpu_custom_call.1} parent=11 // pred_check_branch
          %308 = sbr.rel (%p306) target = $region28
        $region27: #{tpu_custom_call.1} parent=11 // pred_region
          _
        $region28: #{tpu_custom_call.1} parent=11 // pred_fallthru
          _
        // Predicated region
        $region29: #{tpu_custom_call.1} parent=11 // pred_check
          %p309 = pneg %p256
        $region30: #{tpu_custom_call.1} parent=11 // pred_check_branch
          %311 = sbr.rel (%p309) target = $region32
        $region31: #{tpu_custom_call.1} parent=11 // pred_region
          _
        $region32: #{tpu_custom_call.1} parent=11 // pred_fallthru
          _
      $region12: #{tpu_custom_call.1} parent=5 // pred_fallthru
        _
      %p312 = scmp.lt.s32.totalorder %s29, 2
      // Predicated region
      $region33: #{tpu_custom_call.1} parent=5 // pred_check
        %p313 = pneg %p312
      $region34: #{tpu_custom_call.1} parent=5 // pred_check_branch
        %315 = sbr.rel (%p313) target = $region36
      $region35: #{tpu_custom_call.1} parent=5 // pred_region
        // Predicated region
        $region37: #{tpu_custom_call.1} parent=35 // pred_check
          %p316 = pneg %p77
        $region38: #{tpu_custom_call.1} parent=35 // pred_check_branch
          %318 = sbr.rel (%p316) target = $region40
        $region39: #{tpu_custom_call.1} parent=35 // pred_region
          %s319 = sld [smem:[#allocation4 + %s36]]
          %s320 = sld [smem:[#allocation5 + %s36]]
          %p321 = scmp.gt.s32.totalorder %s320, 1
          %s322 = scalar_select %p321, %s320, 1
          %s323 = ssub.s32 %s322, 1
          %p324 = scmp.lt.s32.totalorder %s37, %s323
          %s325 = scalar_select %p324, %s37, %s323
          %s326 = sadd.s32 %s319, %s325
          %s327 = smul.u32 8, %s326
          %p328 = scmp.lt.s32.totalorder %s327, 7
          %s329 = scalar_select %p328, %s327, 7
          %s330 = scalar_lea.vmem %s2, %s329
          %s331 = sld [smem:[#allocation4 + %s36]]
          %s332 = sld [smem:[#allocation5 + %s36]]
          %p333 = scmp.gt.s32.totalorder %s332, 1
          %s334 = scalar_select %p333, %s332, 1
          %s335 = ssub.s32 %s334, 1
          %p336 = scmp.lt.s32.totalorder %s37, %s335
          %s337 = scalar_select %p336, %s37, %s335
          %s338 = sadd.s32 %s331, %s337
          %s339 = smul.u32 8, %s338
        $region40: #{tpu_custom_call.1} parent=35 // pred_fallthru
          _
        // Predicated region
        $region41: #{tpu_custom_call.1} parent=35 // pred_check
          %p340 = pneg %p103
        $region42: #{tpu_custom_call.1} parent=35 // pred_check_branch
          %342 = sbr.rel (%p340) target = $region44
        $region43: #{tpu_custom_call.1} parent=35 // pred_region
          %p343 = scmp.lt.s32.totalorder %s36, 1
          %s344 = scalar_select %p343, %s36, 1
          %s345 = smul.addr %s344, 4
          %s346 = scalar_lea.vmem %s3, %s345
        $region44: #{tpu_custom_call.1} parent=35 // pred_fallthru
          _
        // Predicated region
        $region45: #{tpu_custom_call.1} parent=35 // pred_check
          %p347 = pneg %p145
        $region46: #{tpu_custom_call.1} parent=35 // pred_check_branch
          %349 = sbr.rel (%p347) target = $region48
        $region47: #{tpu_custom_call.1} parent=35 // pred_region
          %s350 = sld [smem:[#allocation4 + %s36]]
          %s351 = sld [smem:[#allocation5 + %s36]]
          %p352 = scmp.gt.s32.totalorder %s351, 1
          %s353 = scalar_select %p352, %s351, 1
          %s354 = ssub.s32 %s353, 1
          %p355 = scmp.lt.s32.totalorder %s37, %s354
          %s356 = scalar_select %p355, %s37, %s354
          %s357 = sadd.s32 %s350, %s356
          %s358 = smul.u32 128, %s357
          %p359 = scmp.lt.s32.totalorder %s358, 127
          %s360 = scalar_select %p359, %s358, 127
          %s361 = smul.addr %s360, 4
          %s362 = scalar_lea.vmem %s4, %s361
          %s363 = sld [smem:[#allocation4 + %s36]]
          %s364 = sld [smem:[#allocation5 + %s36]]
          %p365 = scmp.gt.s32.totalorder %s364, 1
          %s366 = scalar_select %p365, %s364, 1
          %s367 = ssub.s32 %s366, 1
          %p368 = scmp.lt.s32.totalorder %s37, %s367
          %s369 = scalar_select %p368, %s37, %s367
          %s370 = sadd.s32 %s363, %s369
          %s371 = smul.u32 128, %s370
        $region48: #{tpu_custom_call.1} parent=35 // pred_fallthru
          _
      $region36: #{tpu_custom_call.1} parent=5 // pred_fallthru
        _
      %p372 = scmp.le.s32.totalorder 1, %s29
      %p373 = scmp.lt.s32.totalorder %s29, 3
      %p374 = pnand %p372, %p373
      %p375 = pneg %p374
      // Predicated region
      $region49: #{tpu_custom_call.1} parent=5 // pred_check
        _
      $region50: #{tpu_custom_call.1} parent=5 // pred_check_branch
        %377 = sbr.rel (%p374) target = $region52
      $region51: #{tpu_custom_call.1} parent=5 // pred_region
        %s378 = ssub.s32 %s29, 1
        %s379 = sld [smem:[#allocation4 + %s38]]
        %s380 = sld [smem:[#allocation5 + %s38]]
        %p381 = scmp.gt.s32.totalorder %s380, 1
        %s382 = scalar_select %p381, %s380, 1
        %s383 = ssub.s32 %s382, 1
        %p384 = scmp.lt.s32.totalorder %s39, %s383
        %s385 = scalar_select %p384, %s39, %s383
        %s386 = sadd.s32 %s379, %s385
        %s387 = smul.u32 8, %s386
        %p388 = scmp.lt.s32.totalorder %s387, 7
        %s389 = scalar_select %p388, %s387, 7
        %s390 = scalar_lea.vmem %s2, %s389
        %p391 = pneg %p83
        %p392 = pneg %p80
        %p393 = scmp.lt.s32.totalorder %s38, 1
        %s394 = scalar_select %p393, %s38, 1
        %s395 = smul.addr %s394, 4
        %s396 = scalar_lea.vmem %s3, %s395
        %p397 = pneg %p109
        %p398 = pneg %p106
        %s399 = sld [smem:[#allocation4 + %s38]]
        %s400 = sld [smem:[#allocation5 + %s38]]
        %p401 = scmp.gt.s32.totalorder %s400, 1
        %s402 = scalar_select %p401, %s400, 1
        %s403 = ssub.s32 %s402, 1
        %p404 = scmp.lt.s32.totalorder %s39, %s403
        %s405 = scalar_select %p404, %s39, %s403
        %s406 = sadd.s32 %s399, %s405
        %s407 = smul.u32 128, %s406
        %p408 = scmp.lt.s32.totalorder %s407, 127
        %s409 = scalar_select %p408, %s407, 127
        %s410 = smul.addr %s409, 4
        %s411 = scalar_lea.vmem %s4, %s410
        %p412 = pneg %p151
        %p413 = pneg %p148
        %p414 = pneg %p172
        %p415 = pneg %p169
        %p416 = pneg %p193
        %p417 = pneg %p190
        %p418 = pneg %p214
        %p419 = pneg %p211
        %p420 = pneg %p235
        %p421 = pneg %p232
        %p422 = pneg %p256
        %p423 = pneg %p253
        %p424 = pneg %p282
        %p425 = pneg %p279
        %s426 = sand.u32 %s269, 1
        %s427 = scalar_lea.sflag [#allocation7], %s426
        %s428 = sand.u32 %s269, 1
        %s429 = smul.addr %s428, 8
        %s430 = scalar_lea.vmem [#allocation6], %s429
        %s431 = sld [smem:[#allocation4 + %s38]]
        %s432 = sld [smem:[#allocation5 + %s38]]
        %p433 = scmp.gt.s32.totalorder %s432, 1
        %s434 = scalar_select %p433, %s432, 1
        %s435 = ssub.s32 %s434, 1
        %p436 = scmp.lt.s32.totalorder %s39, %s435
        %s437 = scalar_select %p436, %s39, %s435
        %s438 = sadd.s32 %s431, %s437
        %s439 = smul.u32 8, %s438
        %p440 = scmp.lt.s32.totalorder %s439, 7
        %s441 = scalar_select %p440, %s439, 7
        %s442 = scalar_lea.vmem %s2, %s441
        %s443 = sld [smem:[#allocation4 + %s38]]
        %s444 = sld [smem:[#allocation5 + %s38]]
        %p445 = scmp.gt.s32.totalorder %s444, 1
        %s446 = scalar_select %p445, %s444, 1
        %s447 = ssub.s32 %s446, 1
        %p448 = scmp.lt.s32.totalorder %s39, %s447
        %s449 = scalar_select %p448, %s39, %s447
        %s450 = sadd.s32 %s443, %s449
        %s451 = smul.u32 8, %s450
        %p452 = scmp.lt.s32.totalorder %s38, 1
        %s453 = scalar_select %p452, %s38, 1
        %s454 = smul.addr %s453, 4
        %s455 = scalar_lea.vmem %s3, %s454
        %s456 = sld [smem:[#allocation4 + %s38]]
        %s457 = sld [smem:[#allocation5 + %s38]]
        %p458 = scmp.gt.s32.totalorder %s457, 1
        %s459 = scalar_select %p458, %s457, 1
        %s460 = ssub.s32 %s459, 1
        %p461 = scmp.lt.s32.totalorder %s39, %s460
        %s462 = scalar_select %p461, %s39, %s460
        %s463 = sadd.s32 %s456, %s462
        %s464 = smul.u32 128, %s463
        %p465 = scmp.lt.s32.totalorder %s464, 127
        %s466 = scalar_select %p465, %s464, 127
        %s467 = smul.addr %s466, 4
        %s468 = scalar_lea.vmem %s4, %s467
        %s469 = sld [smem:[#allocation4 + %s38]]
        %s470 = sld [smem:[#allocation5 + %s38]]
        %p471 = scmp.gt.s32.totalorder %s470, 1
        %s472 = scalar_select %p471, %s470, 1
        %s473 = ssub.s32 %s472, 1
        %p474 = scmp.lt.s32.totalorder %s39, %s473
        %s475 = scalar_select %p474, %s39, %s473
        %s476 = sadd.s32 %s469, %s475
        %s477 = smul.u32 128, %s476
        %p479 = scmp.eq.s32.totalorder %s39, 0
        // Predicated region
        $region53: #{tpu_custom_call.1} parent=51 // pred_check
          %p480 = pneg %p479
        $region54: #{tpu_custom_call.1} parent=51 // pred_check_branch
          %482 = sbr.rel (%p480) target = $region56
        $region55: #{tpu_custom_call.1} parent=51 // pred_region
          %vm483 = vcmask 64512
          %484 = vst.msk [vmem:[#allocation2] sm:$0xff] %vm483, 0.0
        $region56: #{tpu_custom_call.1} parent=51 // pred_fallthru
          _
        %s485 = sld [smem:[#allocation5 + %s38]]
        %p486 = scmp.lt.s32.totalorder %s39, %s485
        // Predicated region
        $region57: #{tpu_custom_call.1} parent=51 // pred_check
          %p487 = pneg %p486
        $region58: #{tpu_custom_call.1} parent=51 // pred_check_branch
          %489 = sbr.rel (%p487) target = $region60
        $region59: #{tpu_custom_call.1} parent=51 // pred_region
          %v490 = vld [vmem:[%s442] sm:$0xff]
          %s491 = smul.u32 %s38, 8
          %v492 = vstv %s491
          %v493 = vsub.s32 %v490, %v492
          %v494 = vlaneseq
          %v495 = vshrl.u32 %v494, 7
          %v496 = vlaneseq
          %v497 = vshrl.u32 %v496, 7
          %v498 = vsub.s32 0, %v497
          %v499 = vrot.slane %v493, %v498
          %v500 = vlaneseq
          %v501 = vshrl.u32 %v500, 7
          %v502 = vsub.s32 1, %v501
          %v503 = vrot.slane %v493, %v502
          %v504 = vlaneseq
          %v505 = vshrl.u32 %v504, 7
          %v506 = vsub.s32 2, %v505
          %v507 = vrot.slane %v493, %v506
          %v508 = vlaneseq
          %v509 = vshrl.u32 %v508, 7
          %v510 = vsub.s32 3, %v509
          %v511 = vrot.slane %v493, %v510
          %v512 = vlaneseq
          %v513 = vshrl.u32 %v512, 7
          %v514 = vsub.s32 4, %v513
          %v515 = vrot.slane %v493, %v514
          %v516 = vlaneseq
          %v517 = vshrl.u32 %v516, 7
          %v518 = vsub.s32 5, %v517
          %v519 = vrot.slane %v493, %v518
          %v520 = vlaneseq
          %v521 = vshrl.u32 %v520, 7
          %v522 = vsub.s32 6, %v521
          %v523 = vrot.slane %v493, %v522
          %v524 = vlaneseq
          %v525 = vshrl.u32 %v524, 7
          %v526 = vsub.s32 7, %v525
          %v527 = vrot.slane %v493, %v526
          %vm528 = vcmp.eq.s32.totalorder %v499, %v495
          %vm529 = vcmp.eq.s32.totalorder %v503, %v495
          %vm530 = vcmp.eq.s32.totalorder %v507, %v495
          %vm531 = vcmp.eq.s32.totalorder %v511, %v495
          %vm532 = vcmp.eq.s32.totalorder %v515, %v495
          %vm533 = vcmp.eq.s32.totalorder %v519, %v495
          %vm534 = vcmp.eq.s32.totalorder %v523, %v495
          %vm535 = vcmp.eq.s32.totalorder %v527, %v495
          %v536 = vsel %vm528, 1, 0
          %v537 = vsel %vm529, 1, 0
          %v538 = vsel %vm530, 1, 0
          %v539 = vsel %vm531, 1, 0
          %v540 = vsel %vm532, 1, 0
          %v541 = vsel %vm533, 1, 0
          %v542 = vsel %vm534, 1, 0
          %v543 = vsel %vm535, 1, 0
          %v544 = vcvt.s32.f32 %v536
          %v545 = vcvt.s32.f32 %v537
          %v546 = vcvt.s32.f32 %v538
          %v547 = vcvt.s32.f32 %v539
          %v548 = vcvt.s32.f32 %v540
          %v549 = vcvt.s32.f32 %v541
          %v550 = vcvt.s32.f32 %v542
          %v551 = vcvt.s32.f32 %v543
          %v552 = vpack.c.bf16 %v544, %v544
          %v553 = vpack.c.bf16 %v545, %v545
          %v554 = vpack.c.bf16 %v546, %v546
          %v555 = vpack.c.bf16 %v547, %v547
          %v556 = vpack.c.bf16 %v548, %v548
          %v557 = vpack.c.bf16 %v549, %v549
          %v558 = vpack.c.bf16 %v550, %v550
          %v559 = vpack.c.bf16 %v551, %v551
          %v560 = vld [vmem:[#allocation2] sm:$0xff]
          %v561 = vld [vmem:[%s468] sm:$0xf]
          %v562 = vld [vmem:[%s468 + $0x4] sm:$0xf]
          %v563 = vld [vmem:[%s468 + $0x8] sm:$0xf]
          %v564 = vld [vmem:[%s468 + $0xc] sm:$0xf]
          %v565 = vld [vmem:[%s468 + $0x10] sm:$0xf]
          %v566 = vld [vmem:[%s468 + $0x14] sm:$0xf]
          %v567 = vld [vmem:[%s468 + $0x18] sm:$0xf]
          %v568 = vld [vmem:[%s468 + $0x1c] sm:$0xf]
          %v569 = vld [vmem:[%s468 + $0x20] sm:$0xf]
          %v570 = vld [vmem:[%s468 + $0x24] sm:$0xf]
          %v571 = vld [vmem:[%s468 + $0x28] sm:$0xf]
          %v572 = vld [vmem:[%s468 + $0x2c] sm:$0xf]
          %v573 = vld [vmem:[%s468 + $0x30] sm:$0xf]
          %v574 = vld [vmem:[%s468 + $0x34] sm:$0xf]
          %v575 = vld [vmem:[%s468 + $0x38] sm:$0xf]
          %v576 = vld [vmem:[%s468 + $0x3c] sm:$0xf]
          %v577 = vld [vmem:[%s468 + $0x40] sm:$0xf]
          %v578 = vld [vmem:[%s468 + $0x44] sm:$0xf]
          %v579 = vld [vmem:[%s468 + $0x48] sm:$0xf]
          %v580 = vld [vmem:[%s468 + $0x4c] sm:$0xf]
          %v581 = vld [vmem:[%s468 + $0x50] sm:$0xf]
          %v582 = vld [vmem:[%s468 + $0x54] sm:$0xf]
          %v583 = vld [vmem:[%s468 + $0x58] sm:$0xf]
          %v584 = vld [vmem:[%s468 + $0x5c] sm:$0xf]
          %v585 = vld [vmem:[%s468 + $0x60] sm:$0xf]
          %v586 = vld [vmem:[%s468 + $0x64] sm:$0xf]
          %v587 = vld [vmem:[%s468 + $0x68] sm:$0xf]
          %v588 = vld [vmem:[%s468 + $0x6c] sm:$0xf]
          %v589 = vld [vmem:[%s468 + $0x70] sm:$0xf]
          %v590 = vld [vmem:[%s468 + $0x74] sm:$0xf]
          %v591 = vld [vmem:[%s468 + $0x78] sm:$0xf]
          %v592 = vld [vmem:[%s468 + $0x7c] sm:$0xf]
          %v593 = vld [vmem:[%s468 + $0x80] sm:$0xf]
          %v594 = vld [vmem:[%s468 + $0x84] sm:$0xf]
          %v595 = vld [vmem:[%s468 + $0x88] sm:$0xf]
          %v596 = vld [vmem:[%s468 + $0x8c] sm:$0xf]
          %v597 = vld [vmem:[%s468 + $0x90] sm:$0xf]
          %v598 = vld [vmem:[%s468 + $0x94] sm:$0xf]
          %v599 = vld [vmem:[%s468 + $0x98] sm:$0xf]
          %v600 = vld [vmem:[%s468 + $0x9c] sm:$0xf]
          %v601 = vld [vmem:[%s468 + $0xa0] sm:$0xf]
          %v602 = vld [vmem:[%s468 + $0xa4] sm:$0xf]
          %v603 = vld [vmem:[%s468 + $0xa8] sm:$0xf]
          %v604 = vld [vmem:[%s468 + $0xac] sm:$0xf]
          %v605 = vld [vmem:[%s468 + $0xb0] sm:$0xf]
          %v606 = vld [vmem:[%s468 + $0xb4] sm:$0xf]
          %v607 = vld [vmem:[%s468 + $0xb8] sm:$0xf]
          %v608 = vld [vmem:[%s468 + $0xbc] sm:$0xf]
          %v609 = vld [vmem:[%s468 + $0xc0] sm:$0xf]
          %v610 = vld [vmem:[%s468 + $0xc4] sm:$0xf]
          %v611 = vld [vmem:[%s468 + $0xc8] sm:$0xf]
          %v612 = vld [vmem:[%s468 + $0xcc] sm:$0xf]
          %v613 = vld [vmem:[%s468 + $0xd0] sm:$0xf]
          %v614 = vld [vmem:[%s468 + $0xd4] sm:$0xf]
          %v615 = vld [vmem:[%s468 + $0xd8] sm:$0xf]
          %v616 = vld [vmem:[%s468 + $0xdc] sm:$0xf]
          %v617 = vld [vmem:[%s468 + $0xe0] sm:$0xf]
          %v618 = vld [vmem:[%s468 + $0xe4] sm:$0xf]
          %v619 = vld [vmem:[%s468 + $0xe8] sm:$0xf]
          %v620 = vld [vmem:[%s468 + $0xec] sm:$0xf]
          %v621 = vld [vmem:[%s468 + $0xf0] sm:$0xf]
          %v622 = vld [vmem:[%s468 + $0xf4] sm:$0xf]
          %v623 = vld [vmem:[%s468 + $0xf8] sm:$0xf]
          %v624 = vld [vmem:[%s468 + $0xfc] sm:$0xf]
          %v625 = vld [vmem:[%s468 + $0x100] sm:$0xf]
          %v626 = vld [vmem:[%s468 + $0x104] sm:$0xf]
          %v627 = vld [vmem:[%s468 + $0x108] sm:$0xf]
          %v628 = vld [vmem:[%s468 + $0x10c] sm:$0xf]
          %v629 = vld [vmem:[%s468 + $0x110] sm:$0xf]
          %v630 = vld [vmem:[%s468 + $0x114] sm:$0xf]
          %v631 = vld [vmem:[%s468 + $0x118] sm:$0xf]
          %v632 = vld [vmem:[%s468 + $0x11c] sm:$0xf]
          %v633 = vld [vmem:[%s468 + $0x120] sm:$0xf]
          %v634 = vld [vmem:[%s468 + $0x124] sm:$0xf]
          %v635 = vld [vmem:[%s468 + $0x128] sm:$0xf]
          %v636 = vld [vmem:[%s468 + $0x12c] sm:$0xf]
          %v637 = vld [vmem:[%s468 + $0x130] sm:$0xf]
          %v638 = vld [vmem:[%s468 + $0x134] sm:$0xf]
          %v639 = vld [vmem:[%s468 + $0x138] sm:$0xf]
          %v640 = vld [vmem:[%s468 + $0x13c] sm:$0xf]
          %v641 = vld [vmem:[%s468 + $0x140] sm:$0xf]
          %v642 = vld [vmem:[%s468 + $0x144] sm:$0xf]
          %v643 = vld [vmem:[%s468 + $0x148] sm:$0xf]
          %v644 = vld [vmem:[%s468 + $0x14c] sm:$0xf]
          %v645 = vld [vmem:[%s468 + $0x150] sm:$0xf]
          %v646 = vld [vmem:[%s468 + $0x154] sm:$0xf]
          %v647 = vld [vmem:[%s468 + $0x158] sm:$0xf]
          %v648 = vld [vmem:[%s468 + $0x15c] sm:$0xf]
          %v649 = vld [vmem:[%s468 + $0x160] sm:$0xf]
          %v650 = vld [vmem:[%s468 + $0x164] sm:$0xf]
          %v651 = vld [vmem:[%s468 + $0x168] sm:$0xf]
          %v652 = vld [vmem:[%s468 + $0x16c] sm:$0xf]
          %v653 = vld [vmem:[%s468 + $0x170] sm:$0xf]
          %v654 = vld [vmem:[%s468 + $0x174] sm:$0xf]
          %v655 = vld [vmem:[%s468 + $0x178] sm:$0xf]
          %v656 = vld [vmem:[%s468 + $0x17c] sm:$0xf]
          %v657 = vld [vmem:[%s468 + $0x180] sm:$0xf]
          %v658 = vld [vmem:[%s468 + $0x184] sm:$0xf]
          %v659 = vld [vmem:[%s468 + $0x188] sm:$0xf]
          %v660 = vld [vmem:[%s468 + $0x18c] sm:$0xf]
          %v661 = vld [vmem:[%s468 + $0x190] sm:$0xf]
          %v662 = vld [vmem:[%s468 + $0x194] sm:$0xf]
          %v663 = vld [vmem:[%s468 + $0x198] sm:$0xf]
          %v664 = vld [vmem:[%s468 + $0x19c] sm:$0xf]
          %v665 = vld [vmem:[%s468 + $0x1a0] sm:$0xf]
          %v666 = vld [vmem:[%s468 + $0x1a4] sm:$0xf]
          %v667 = vld [vmem:[%s468 + $0x1a8] sm:$0xf]
          %v668 = vld [vmem:[%s468 + $0x1ac] sm:$0xf]
          %v669 = vld [vmem:[%s468 + $0x1b0] sm:$0xf]
          %v670 = vld [vmem:[%s468 + $0x1b4] sm:$0xf]
          %v671 = vld [vmem:[%s468 + $0x1b8] sm:$0xf]
          %v672 = vld [vmem:[%s468 + $0x1bc] sm:$0xf]
          %v673 = vld [vmem:[%s468 + $0x1c0] sm:$0xf]
          %v674 = vld [vmem:[%s468 + $0x1c4] sm:$0xf]
          %v675 = vld [vmem:[%s468 + $0x1c8] sm:$0xf]
          %v676 = vld [vmem:[%s468 + $0x1cc] sm:$0xf]
          %v677 = vld [vmem:[%s468 + $0x1d0] sm:$0xf]
          %v678 = vld [vmem:[%s468 + $0x1d4] sm:$0xf]
          %v679 = vld [vmem:[%s468 + $0x1d8] sm:$0xf]
          %v680 = vld [vmem:[%s468 + $0x1dc] sm:$0xf]
          %v681 = vld [vmem:[%s468 + $0x1e0] sm:$0xf]
          %v682 = vld [vmem:[%s468 + $0x1e4] sm:$0xf]
          %v683 = vld [vmem:[%s468 + $0x1e8] sm:$0xf]
          %v684 = vld [vmem:[%s468 + $0x1ec] sm:$0xf]
          %v685 = vld [vmem:[%s468 + $0x1f0] sm:$0xf]
          %v686 = vld [vmem:[%s468 + $0x1f4] sm:$0xf]
          %v687 = vld [vmem:[%s468 + $0x1f8] sm:$0xf]
          %v688 = vld [vmem:[%s468 + $0x1fc] sm:$0xf]
          %v817 = vunpack.c.l.b16 %v561
          %v818 = vunpack.c.l.b16 %v562
          %v819 = vunpack.c.l.b16 %v563
          %v820 = vunpack.c.l.b16 %v564
          %v821 = vunpack.c.l.b16 %v565
          %v822 = vunpack.c.l.b16 %v566
          %v823 = vunpack.c.l.b16 %v567
          %v824 = vunpack.c.l.b16 %v568
          %v825 = vunpack.c.l.b16 %v569
          %v826 = vunpack.c.l.b16 %v570
          %v827 = vunpack.c.l.b16 %v571
          %v828 = vunpack.c.l.b16 %v572
          %v829 = vunpack.c.l.b16 %v573
          %v830 = vunpack.c.l.b16 %v574
          %v831 = vunpack.c.l.b16 %v575
          %v832 = vunpack.c.l.b16 %v576
          %v833 = vunpack.c.l.b16 %v577
          %v834 = vunpack.c.l.b16 %v578
          %v835 = vunpack.c.l.b16 %v579
          %v836 = vunpack.c.l.b16 %v580
          %v837 = vunpack.c.l.b16 %v581
          %v838 = vunpack.c.l.b16 %v582
          %v839 = vunpack.c.l.b16 %v583
          %v840 = vunpack.c.l.b16 %v584
          %v841 = vunpack.c.l.b16 %v585
          %v842 = vunpack.c.l.b16 %v586
          %v843 = vunpack.c.l.b16 %v587
          %v844 = vunpack.c.l.b16 %v588
          %v845 = vunpack.c.l.b16 %v589
          %v846 = vunpack.c.l.b16 %v590
          %v847 = vunpack.c.l.b16 %v591
          %v848 = vunpack.c.l.b16 %v592
          %v849 = vunpack.c.l.b16 %v593
          %v850 = vunpack.c.l.b16 %v594
          %v851 = vunpack.c.l.b16 %v595
          %v852 = vunpack.c.l.b16 %v596
          %v853 = vunpack.c.l.b16 %v597
          %v854 = vunpack.c.l.b16 %v598
          %v855 = vunpack.c.l.b16 %v599
          %v856 = vunpack.c.l.b16 %v600
          %v857 = vunpack.c.l.b16 %v601
          %v858 = vunpack.c.l.b16 %v602
          %v859 = vunpack.c.l.b16 %v603
          %v860 = vunpack.c.l.b16 %v604
          %v861 = vunpack.c.l.b16 %v605
          %v862 = vunpack.c.l.b16 %v606
          %v863 = vunpack.c.l.b16 %v607
          %v864 = vunpack.c.l.b16 %v608
          %v865 = vunpack.c.l.b16 %v609
          %v866 = vunpack.c.l.b16 %v610
          %v867 = vunpack.c.l.b16 %v611
          %v868 = vunpack.c.l.b16 %v612
          %v869 = vunpack.c.l.b16 %v613
          %v870 = vunpack.c.l.b16 %v614
          %v871 = vunpack.c.l.b16 %v615
          %v872 = vunpack.c.l.b16 %v616
          %v873 = vunpack.c.l.b16 %v617
          %v874 = vunpack.c.l.b16 %v618
          %v875 = vunpack.c.l.b16 %v619
          %v876 = vunpack.c.l.b16 %v620
          %v877 = vunpack.c.l.b16 %v621
          %v878 = vunpack.c.l.b16 %v622
          %v879 = vunpack.c.l.b16 %v623
          %v880 = vunpack.c.l.b16 %v624
          %v881 = vunpack.c.l.b16 %v625
          %v882 = vunpack.c.l.b16 %v626
          %v883 = vunpack.c.l.b16 %v627
          %v884 = vunpack.c.l.b16 %v628
          %v885 = vunpack.c.l.b16 %v629
          %v886 = vunpack.c.l.b16 %v630
          %v887 = vunpack.c.l.b16 %v631
          %v888 = vunpack.c.l.b16 %v632
          %v889 = vunpack.c.l.b16 %v633
          %v890 = vunpack.c.l.b16 %v634
          %v891 = vunpack.c.l.b16 %v635
          %v892 = vunpack.c.l.b16 %v636
          %v893 = vunpack.c.l.b16 %v637
          %v894 = vunpack.c.l.b16 %v638
          %v895 = vunpack.c.l.b16 %v639
          %v896 = vunpack.c.l.b16 %v640
          %v897 = vunpack.c.l.b16 %v641
          %v898 = vunpack.c.l.b16 %v642
          %v899 = vunpack.c.l.b16 %v643
          %v900 = vunpack.c.l.b16 %v644
          %v901 = vunpack.c.l.b16 %v645
          %v902 = vunpack.c.l.b16 %v646
          %v903 = vunpack.c.l.b16 %v647
          %v904 = vunpack.c.l.b16 %v648
          %v905 = vunpack.c.l.b16 %v649
          %v906 = vunpack.c.l.b16 %v650
          %v907 = vunpack.c.l.b16 %v651
          %v908 = vunpack.c.l.b16 %v652
          %v909 = vunpack.c.l.b16 %v653
          %v910 = vunpack.c.l.b16 %v654
          %v911 = vunpack.c.l.b16 %v655
          %v912 = vunpack.c.l.b16 %v656
          %v913 = vunpack.c.l.b16 %v657
          %v914 = vunpack.c.l.b16 %v658
          %v915 = vunpack.c.l.b16 %v659
          %v916 = vunpack.c.l.b16 %v660
          %v917 = vunpack.c.l.b16 %v661
          %v918 = vunpack.c.l.b16 %v662
          %v919 = vunpack.c.l.b16 %v663
          %v920 = vunpack.c.l.b16 %v664
          %v921 = vunpack.c.l.b16 %v665
          %v922 = vunpack.c.l.b16 %v666
          %v923 = vunpack.c.l.b16 %v667
          %v924 = vunpack.c.l.b16 %v668
          %v925 = vunpack.c.l.b16 %v669
          %v926 = vunpack.c.l.b16 %v670
          %v927 = vunpack.c.l.b16 %v671
          %v928 = vunpack.c.l.b16 %v672
          %v929 = vunpack.c.l.b16 %v673
          %v930 = vunpack.c.l.b16 %v674
          %v931 = vunpack.c.l.b16 %v675
          %v932 = vunpack.c.l.b16 %v676
          %v933 = vunpack.c.l.b16 %v677
          %v934 = vunpack.c.l.b16 %v678
          %v935 = vunpack.c.l.b16 %v679
          %v936 = vunpack.c.l.b16 %v680
          %v937 = vunpack.c.l.b16 %v681
          %v938 = vunpack.c.l.b16 %v682
          %v939 = vunpack.c.l.b16 %v683
          %v940 = vunpack.c.l.b16 %v684
          %v941 = vunpack.c.l.b16 %v685
          %v942 = vunpack.c.l.b16 %v686
          %v943 = vunpack.c.l.b16 %v687
          %v944 = vunpack.c.l.b16 %v688
          %v945 = vpack.c.b16 %v818, %v817
          %v946 = vpack.c.b16 %v820, %v819
          %v947 = vpack.c.b16 %v822, %v821
          %v948 = vpack.c.b16 %v824, %v823
          %v949 = vpack.c.b16 %v826, %v825
          %v950 = vpack.c.b16 %v828, %v827
          %v951 = vpack.c.b16 %v830, %v829
          %v952 = vpack.c.b16 %v832, %v831
          %v953 = vpack.c.b16 %v834, %v833
          %v954 = vpack.c.b16 %v836, %v835
          %v955 = vpack.c.b16 %v838, %v837
          %v956 = vpack.c.b16 %v840, %v839
          %v957 = vpack.c.b16 %v842, %v841
          %v958 = vpack.c.b16 %v844, %v843
          %v959 = vpack.c.b16 %v846, %v845
          %v960 = vpack.c.b16 %v848, %v847
          %v961 = vpack.c.b16 %v850, %v849
          %v962 = vpack.c.b16 %v852, %v851
          %v963 = vpack.c.b16 %v854, %v853
          %v964 = vpack.c.b16 %v856, %v855
          %v965 = vpack.c.b16 %v858, %v857
          %v966 = vpack.c.b16 %v860, %v859
          %v967 = vpack.c.b16 %v862, %v861
          %v968 = vpack.c.b16 %v864, %v863
          %v969 = vpack.c.b16 %v866, %v865
          %v970 = vpack.c.b16 %v868, %v867
          %v971 = vpack.c.b16 %v870, %v869
          %v972 = vpack.c.b16 %v872, %v871
          %v973 = vpack.c.b16 %v874, %v873
          %v974 = vpack.c.b16 %v876, %v875
          %v975 = vpack.c.b16 %v878, %v877
          %v976 = vpack.c.b16 %v880, %v879
          %v977 = vpack.c.b16 %v882, %v881
          %v978 = vpack.c.b16 %v884, %v883
          %v979 = vpack.c.b16 %v886, %v885
          %v980 = vpack.c.b16 %v888, %v887
          %v981 = vpack.c.b16 %v890, %v889
          %v982 = vpack.c.b16 %v892, %v891
          %v983 = vpack.c.b16 %v894, %v893
          %v984 = vpack.c.b16 %v896, %v895
          %v985 = vpack.c.b16 %v898, %v897
          %v986 = vpack.c.b16 %v900, %v899
          %v987 = vpack.c.b16 %v902, %v901
          %v988 = vpack.c.b16 %v904, %v903
          %v989 = vpack.c.b16 %v906, %v905
          %v990 = vpack.c.b16 %v908, %v907
          %v991 = vpack.c.b16 %v910, %v909
          %v992 = vpack.c.b16 %v912, %v911
          %v993 = vpack.c.b16 %v914, %v913
          %v994 = vpack.c.b16 %v916, %v915
          %v995 = vpack.c.b16 %v918, %v917
          %v996 = vpack.c.b16 %v920, %v919
          %v997 = vpack.c.b16 %v922, %v921
          %v998 = vpack.c.b16 %v924, %v923
          %v999 = vpack.c.b16 %v926, %v925
          %v1000 = vpack.c.b16 %v928, %v927
          %v1001 = vpack.c.b16 %v930, %v929
          %v1002 = vpack.c.b16 %v932, %v931
          %v1003 = vpack.c.b16 %v934, %v933
          %v1004 = vpack.c.b16 %v936, %v935
          %v1005 = vpack.c.b16 %v938, %v937
          %v1006 = vpack.c.b16 %v940, %v939
          %v1007 = vpack.c.b16 %v942, %v941
          %v1008 = vpack.c.b16 %v944, %v943
          %1073 = vmatprep.subr.bf16.mxu0 0
          %1074 = vmatpush1.bf16.msra.mxu0 %v945
          %1075 = vmatprep.subr.bf16.mxu0 0
          %1076 = vmatpush1.bf16.msra.mxu0 %v946
          %1077 = vmatprep.subr.bf16.mxu0 0
          %1078 = vmatpush1.bf16.msra.mxu0 %v947
          %1079 = vmatprep.subr.bf16.mxu0 0
          %1080 = vmatpush1.bf16.msra.mxu0 %v948
          %1081 = vmatprep.subr.bf16.mxu0 0
          %1082 = vmatpush1.bf16.msra.mxu0 %v949
          %1083 = vmatprep.subr.bf16.mxu0 0
          %1084 = vmatpush1.bf16.msra.mxu0 %v950
          %1085 = vmatprep.subr.bf16.mxu0 0
          %1086 = vmatpush1.bf16.msra.mxu0 %v951
          %1087 = vmatprep.subr.bf16.mxu0 0
          %1088 = vmatpush1.bf16.msra.mxu0 %v952
          %1089 = vmatprep.subr.bf16.mxu0 0
          %1090 = vmatpush1.bf16.msra.mxu0 %v953
          %1091 = vmatprep.subr.bf16.mxu0 0
          %1092 = vmatpush1.bf16.msra.mxu0 %v954
          %1093 = vmatprep.subr.bf16.mxu0 0
          %1094 = vmatpush1.bf16.msra.mxu0 %v955
          %1095 = vmatprep.subr.bf16.mxu0 0
          %1096 = vmatpush1.bf16.msra.mxu0 %v956
          %1097 = vmatprep.subr.bf16.mxu0 0
          %1098 = vmatpush1.bf16.msra.mxu0 %v957
          %1099 = vmatprep.subr.bf16.mxu0 0
          %1100 = vmatpush1.bf16.msra.mxu0 %v958
          %1101 = vmatprep.subr.bf16.mxu0 0
          %1102 = vmatpush1.bf16.msra.mxu0 %v959
          %1103 = vmatprep.subr.bf16.mxu0 0
          %1104 = vmatpush1.bf16.msra.mxu0 %v960
          %1105 = vmatprep.mubr.bf16.mxu0 %v553
          %1106 = vmatmul.mubr.bf16.gmra.mrb[0].mxu0 %v552
          %v1107 = vpop.f32.mrb[0].mxu0
          %v1108 = vadd.f32 0.0, %v1107
          %v1109 = vpop.f32.mrb[0].mxu0
          %v1110 = vpop.f32.mrb[0].mxu0
          %v1111 = vpop.f32.mrb[0].mxu0
          %1112 = vdwg.mxu0
          %1113 = vmatprep.subr.bf16.mxu0 0
          %1114 = vmatpush1.bf16.msra.mxu0 %v961
          %1115 = vmatprep.subr.bf16.mxu0 0
          %1116 = vmatpush1.bf16.msra.mxu0 %v962
          %1117 = vmatprep.subr.bf16.mxu0 0
          %1118 = vmatpush1.bf16.msra.mxu0 %v963
          %1119 = vmatprep.subr.bf16.mxu0 0
          %1120 = vmatpush1.bf16.msra.mxu0 %v964
          %1121 = vmatprep.subr.bf16.mxu0 0
          %1122 = vmatpush1.bf16.msra.mxu0 %v965
          %1123 = vmatprep.subr.bf16.mxu0 0
          %1124 = vmatpush1.bf16.msra.mxu0 %v966
          %1125 = vmatprep.subr.bf16.mxu0 0
          %1126 = vmatpush1.bf16.msra.mxu0 %v967
          %1127 = vmatprep.subr.bf16.mxu0 0
          %1128 = vmatpush1.bf16.msra.mxu0 %v968
          %1129 = vmatprep.subr.bf16.mxu0 0
          %1130 = vmatpush1.bf16.msra.mxu0 %v969
          %1131 = vmatprep.subr.bf16.mxu0 0
          %1132 = vmatpush1.bf16.msra.mxu0 %v970
          %1133 = vmatprep.subr.bf16.mxu0 0
          %1134 = vmatpush1.bf16.msra.mxu0 %v971
          %1135 = vmatprep.subr.bf16.mxu0 0
          %1136 = vmatpush1.bf16.msra.mxu0 %v972
          %1137 = vmatprep.subr.bf16.mxu0 0
          %1138 = vmatpush1.bf16.msra.mxu0 %v973
          %1139 = vmatprep.subr.bf16.mxu0 0
          %1140 = vmatpush1.bf16.msra.mxu0 %v974
          %1141 = vmatprep.subr.bf16.mxu0 0
          %1142 = vmatpush1.bf16.msra.mxu0 %v975
          %1143 = vmatprep.subr.bf16.mxu0 0
          %1144 = vmatpush1.bf16.msra.mxu0 %v976
          %1145 = vmatprep.mubr.bf16.mxu0 %v555
          %1146 = vmatmul.mubr.bf16.gmra.mrb[0].mxu0 %v554
          %v1147 = vpop.f32.mrb[0].mxu0
          %v1148 = vadd.f32 %v1108, %v1147
          %v1149 = vpop.f32.mrb[0].mxu0
          %v1150 = vpop.f32.mrb[0].mxu0
          %v1151 = vpop.f32.mrb[0].mxu0
          %1152 = vdwg.mxu0
          %1153 = vmatprep.subr.bf16.mxu0 0
          %1154 = vmatpush1.bf16.msra.mxu0 %v977
          %1155 = vmatprep.subr.bf16.mxu0 0
          %1156 = vmatpush1.bf16.msra.mxu0 %v978
          %1157 = vmatprep.subr.bf16.mxu0 0
          %1158 = vmatpush1.bf16.msra.mxu0 %v979
          %1159 = vmatprep.subr.bf16.mxu0 0
          %1160 = vmatpush1.bf16.msra.mxu0 %v980
          %1161 = vmatprep.subr.bf16.mxu0 0
          %1162 = vmatpush1.bf16.msra.mxu0 %v981
          %1163 = vmatprep.subr.bf16.mxu0 0
          %1164 = vmatpush1.bf16.msra.mxu0 %v982
          %1165 = vmatprep.subr.bf16.mxu0 0
          %1166 = vmatpush1.bf16.msra.mxu0 %v983
          %1167 = vmatprep.subr.bf16.mxu0 0
          %1168 = vmatpush1.bf16.msra.mxu0 %v984
          %1169 = vmatprep.subr.bf16.mxu0 0
          %1170 = vmatpush1.bf16.msra.mxu0 %v985
          %1171 = vmatprep.subr.bf16.mxu0 0
          %1172 = vmatpush1.bf16.msra.mxu0 %v986
          %1173 = vmatprep.subr.bf16.mxu0 0
          %1174 = vmatpush1.bf16.msra.mxu0 %v987
          %1175 = vmatprep.subr.bf16.mxu0 0
          %1176 = vmatpush1.bf16.msra.mxu0 %v988
          %1177 = vmatprep.subr.bf16.mxu0 0
          %1178 = vmatpush1.bf16.msra.mxu0 %v989
          %1179 = vmatprep.subr.bf16.mxu0 0
          %1180 = vmatpush1.bf16.msra.mxu0 %v990
          %1181 = vmatprep.subr.bf16.mxu0 0
          %1182 = vmatpush1.bf16.msra.mxu0 %v991
          %1183 = vmatprep.subr.bf16.mxu0 0
          %1184 = vmatpush1.bf16.msra.mxu0 %v992
          %1185 = vmatprep.mubr.bf16.mxu0 %v557
          %1186 = vmatmul.mubr.bf16.gmra.mrb[0].mxu0 %v556
          %v1187 = vpop.f32.mrb[0].mxu0
          %v1188 = vadd.f32 %v1148, %v1187
          %v1189 = vpop.f32.mrb[0].mxu0
          %v1190 = vpop.f32.mrb[0].mxu0
          %v1191 = vpop.f32.mrb[0].mxu0
          %1192 = vdwg.mxu0
          %1193 = vmatprep.subr.bf16.mxu0 0
          %1194 = vmatpush1.bf16.msra.mxu0 %v993
          %1195 = vmatprep.subr.bf16.mxu0 0
          %1196 = vmatpush1.bf16.msra.mxu0 %v994
          %1197 = vmatprep.subr.bf16.mxu0 0
          %1198 = vmatpush1.bf16.msra.mxu0 %v995
          %1199 = vmatprep.subr.bf16.mxu0 0
          %1200 = vmatpush1.bf16.msra.mxu0 %v996
          %1201 = vmatprep.subr.bf16.mxu0 0
          %1202 = vmatpush1.bf16.msra.mxu0 %v997
          %1203 = vmatprep.subr.bf16.mxu0 0
          %1204 = vmatpush1.bf16.msra.mxu0 %v998
          %1205 = vmatprep.subr.bf16.mxu0 0
          %1206 = vmatpush1.bf16.msra.mxu0 %v999
          %1207 = vmatprep.subr.bf16.mxu0 0
          %1208 = vmatpush1.bf16.msra.mxu0 %v1000
          %1209 = vmatprep.subr.bf16.mxu0 0
          %1210 = vmatpush1.bf16.msra.mxu0 %v1001
          %1211 = vmatprep.subr.bf16.mxu0 0
          %1212 = vmatpush1.bf16.msra.mxu0 %v1002
          %1213 = vmatprep.subr.bf16.mxu0 0
          %1214 = vmatpush1.bf16.msra.mxu0 %v1003
          %1215 = vmatprep.subr.bf16.mxu0 0
          %1216 = vmatpush1.bf16.msra.mxu0 %v1004
          %1217 = vmatprep.subr.bf16.mxu0 0
          %1218 = vmatpush1.bf16.msra.mxu0 %v1005
          %1219 = vmatprep.subr.bf16.mxu0 0
          %1220 = vmatpush1.bf16.msra.mxu0 %v1006
          %1221 = vmatprep.subr.bf16.mxu0 0
          %1222 = vmatpush1.bf16.msra.mxu0 %v1007
          %1223 = vmatprep.subr.bf16.mxu0 0
          %1224 = vmatpush1.bf16.msra.mxu0 %v1008
          %1225 = vmatprep.mubr.bf16.mxu0 %v559
          %1226 = vmatmul.mubr.bf16.gmra.mrb[0].mxu0 %v558
          %v1227 = vpop.f32.mrb[0].mxu0
          %v1228 = vadd.f32 %v1188, %v1227
          %v1229 = vpop.f32.mrb[0].mxu0
          %v1230 = vpop.f32.mrb[0].mxu0
          %v1231 = vpop.f32.mrb[0].mxu0
          %1232 = vdwg.mxu0
          %v1233 = vadd.f32 %v560, %v1228
          %vm1234 = vcmask 64512
          %1235 = vst.msk [vmem:[#allocation2] sm:$0xff] %vm1234, %v1233
        $region60: #{tpu_custom_call.1} parent=51 // pred_fallthru
          _
        // Predicated region
        $region61: #{tpu_custom_call.1} parent=51 // pred_check
          %p1236 = pneg %p479
        $region62: #{tpu_custom_call.1} parent=51 // pred_check_branch
          %1238 = sbr.rel (%p1236) target = $region64
        $region63: #{tpu_custom_call.1} parent=51 // pred_region
          %v1239 = vld [vmem:[#allocation2] sm:$0xff]
          %v1240 = vpack.c.bf16 %v1239, %v1239
          %v1241 = vld [vmem:[%s455] sm:$0xf]
          %v1242 = vld [vmem:[%s5] sm:$0xf]
          %v1243 = vld [vmem:[%s6] sm:$0xf]
          %vm1244 = vcmask 64512
          %v1246 = vsel %vm1244, %v1240, 0
          %vm1248 = vcmask 1043456
          %v1250 = vsel %vm1248, %v1243, 0
          %1252 = vmatprep.subr.bf16.mxu0 0
          %1253 = vmatpush1.bf16.msra.mxu0 %v1250
          %1254 = vmatprep.subr.bf16.mxu0 0
          %1255 = vmatpush1.bf16.msra.mxu0 0
          %1256 = vmatprep.subr.bf16.mxu0 0
          %1257 = vmatpush1.bf16.msra.mxu0 0
          %1258 = vmatprep.subr.bf16.mxu0 0
          %1259 = vmatpush1.bf16.msra.mxu0 0
          %1260 = vmatprep.subr.bf16.mxu0 0
          %1261 = vmatpush1.bf16.msra.mxu0 0
          %1262 = vmatprep.subr.bf16.mxu0 0
          %1263 = vmatpush1.bf16.msra.mxu0 0
          %1264 = vmatprep.subr.bf16.mxu0 0
          %1265 = vmatpush1.bf16.msra.mxu0 0
          %1266 = vmatprep.subr.bf16.mxu0 0
          %1267 = vmatpush1.bf16.msra.mxu0 0
          %1268 = vmatprep.subr.bf16.mxu0 0
          %1269 = vmatpush1.bf16.msra.mxu0 0
          %1270 = vmatprep.subr.bf16.mxu0 0
          %1271 = vmatpush1.bf16.msra.mxu0 0
          %1272 = vmatprep.subr.bf16.mxu0 0
          %1273 = vmatpush1.bf16.msra.mxu0 0
          %1274 = vmatprep.subr.bf16.mxu0 0
          %1275 = vmatpush1.bf16.msra.mxu0 0
          %1276 = vmatprep.subr.bf16.mxu0 0
          %1277 = vmatpush1.bf16.msra.mxu0 0
          %1278 = vmatprep.subr.bf16.mxu0 0
          %1279 = vmatpush1.bf16.msra.mxu0 0
          %1280 = vmatprep.subr.bf16.mxu0 0
          %1281 = vmatpush1.bf16.msra.mxu0 0
          %1282 = vmatprep.subr.bf16.mxu0 0
          %1283 = vmatpush1.bf16.msra.mxu0 0
          %1284 = vmatprep.mubr.bf16.mxu0 0
          %1285 = vmatmul.mubr.bf16.gmra.mrb[0].mxu0 %v1246
          %v1286 = vpop.f32.mrb[0].mxu0
          %v1287 = vadd.f32 0.0, %v1286
          %v1288 = vpop.f32.mrb[0].mxu0
          %v1289 = vpop.f32.mrb[0].mxu0
          %v1290 = vpop.f32.mrb[0].mxu0
          %1291 = vdwg.mxu0
          %v1293 = vsel %vm1244, %v1241, 0
          %v1296 = vsel %vm1248, %v1242, 0
          %1298 = vmatprep.subr.bf16.mxu0 0
          %1299 = vmatpush1.bf16.msra.mxu0 %v1296
          %1300 = vmatprep.subr.bf16.mxu0 0
          %1301 = vmatpush1.bf16.msra.mxu0 0
          %1302 = vmatprep.subr.bf16.mxu0 0
          %1303 = vmatpush1.bf16.msra.mxu0 0
          %1304 = vmatprep.subr.bf16.mxu0 0
          %1305 = vmatpush1.bf16.msra.mxu0 0
          %1306 = vmatprep.subr.bf16.mxu0 0
          %1307 = vmatpush1.bf16.msra.mxu0 0
          %1308 = vmatprep.subr.bf16.mxu0 0
          %1309 = vmatpush1.bf16.msra.mxu0 0
          %1310 = vmatprep.subr.bf16.mxu0 0
          %1311 = vmatpush1.bf16.msra.mxu0 0
          %1312 = vmatprep.subr.bf16.mxu0 0
          %1313 = vmatpush1.bf16.msra.mxu0 0
          %1314 = vmatprep.subr.bf16.mxu0 0
          %1315 = vmatpush1.bf16.msra.mxu0 0
          %1316 = vmatprep.subr.bf16.mxu0 0
          %1317 = vmatpush1.bf16.msra.mxu0 0
          %1318 = vmatprep.subr.bf16.mxu0 0
          %1319 = vmatpush1.bf16.msra.mxu0 0
          %1320 = vmatprep.subr.bf16.mxu0 0
          %1321 = vmatpush1.bf16.msra.mxu0 0
          %1322 = vmatprep.subr.bf16.mxu0 0
          %1323 = vmatpush1.bf16.msra.mxu0 0
          %1324 = vmatprep.subr.bf16.mxu0 0
          %1325 = vmatpush1.bf16.msra.mxu0 0
          %1326 = vmatprep.subr.bf16.mxu0 0
          %1327 = vmatpush1.bf16.msra.mxu0 0
          %1328 = vmatprep.subr.bf16.mxu0 0
          %1329 = vmatpush1.bf16.msra.mxu0 0
          %1330 = vmatprep.mubr.bf16.mxu0 0
          %1331 = vmatmul.mubr.bf16.gmra.mrb[0].mxu0 %v1293
          %v1332 = vpop.f32.mrb[0].mxu0
          %v1333 = vadd.f32 %v1287, %v1332
          %v1334 = vpop.f32.mrb[0].mxu0
          %v1335 = vpop.f32.mrb[0].mxu0
          %v1336 = vpop.f32.mrb[0].mxu0
          %1337 = vdwg.mxu0
          %v1338 = vld [vmem:[%s7] sm:$0x1]
          %v1340 = vlaneseq
          %v1341 = vshrl.u32 %v1340, 7
          %v1342 = vsub.s32 0, %v1341
          %v1343 = vrot.slane %v1338, %v1342
          %v1345 = vadd.f32 %v1333, %v1343
          %v1346 = vmax.f32 %v1345, 0.0
          %v1347 = vpack.c.bf16 %v1346, %v1346
          %v1348 = vld [vmem:[%s8] sm:$0xf]
          %v1349 = vld [vmem:[%s8 + $0x4] sm:$0xf]
          %v1350 = vld [vmem:[%s8 + $0x8] sm:$0xf]
          %v1351 = vld [vmem:[%s8 + $0xc] sm:$0xf]
          %v1352 = vld [vmem:[%s8 + $0x10] sm:$0xf]
          %v1353 = vld [vmem:[%s8 + $0x14] sm:$0xf]
          %v1354 = vld [vmem:[%s8 + $0x18] sm:$0xf]
          %v1355 = vld [vmem:[%s8 + $0x1c] sm:$0xf]
          %v1356 = vld [vmem:[%s8 + $0x20] sm:$0xf]
          %v1357 = vld [vmem:[%s8 + $0x24] sm:$0xf]
          %v1358 = vld [vmem:[%s8 + $0x28] sm:$0xf]
          %v1359 = vld [vmem:[%s8 + $0x2c] sm:$0xf]
          %v1360 = vld [vmem:[%s8 + $0x30] sm:$0xf]
          %v1361 = vld [vmem:[%s8 + $0x34] sm:$0xf]
          %v1362 = vld [vmem:[%s8 + $0x38] sm:$0xf]
          %v1363 = vld [vmem:[%s8 + $0x3c] sm:$0xf]
          %v1364 = vld [vmem:[%s9] sm:$0x1]
          %v1366 = vlaneseq
          %v1367 = vshrl.u32 %v1366, 7
          %v1368 = vsub.s32 0, %v1367
          %v1369 = vrot.slane %v1364, %v1368
          %v1387 = vunpack.c.l.b16 %v1348
          %v1388 = vunpack.c.l.b16 %v1349
          %v1389 = vunpack.c.l.b16 %v1350
          %v1390 = vunpack.c.l.b16 %v1351
          %v1391 = vunpack.c.l.b16 %v1352
          %v1392 = vunpack.c.l.b16 %v1353
          %v1393 = vunpack.c.l.b16 %v1354
          %v1394 = vunpack.c.l.b16 %v1355
          %v1395 = vunpack.c.l.b16 %v1356
          %v1396 = vunpack.c.l.b16 %v1357
          %v1397 = vunpack.c.l.b16 %v1358
          %v1398 = vunpack.c.l.b16 %v1359
          %v1399 = vunpack.c.l.b16 %v1360
          %v1400 = vunpack.c.l.b16 %v1361
          %v1401 = vunpack.c.l.b16 %v1362
          %v1402 = vunpack.c.l.b16 %v1363
          %v1403 = vpack.c.b16 %v1388, %v1387
          %v1404 = vpack.c.b16 %v1390, %v1389
          %v1405 = vpack.c.b16 %v1392, %v1391
          %v1406 = vpack.c.b16 %v1394, %v1393
          %v1407 = vpack.c.b16 %v1396, %v1395
          %v1408 = vpack.c.b16 %v1398, %v1397
          %v1409 = vpack.c.b16 %v1400, %v1399
          %v1410 = vpack.c.b16 %v1402, %v1401
          %1419 = vmatprep.subr.bf16.mxu0 0
          %1420 = vmatpush1.bf16.msra.mxu0 %v1403
          %1421 = vmatprep.subr.bf16.mxu0 0
          %1422 = vmatpush1.bf16.msra.mxu0 %v1404
          %1423 = vmatprep.subr.bf16.mxu0 0
          %1424 = vmatpush1.bf16.msra.mxu0 %v1405
          %1425 = vmatprep.subr.bf16.mxu0 0
          %1426 = vmatpush1.bf16.msra.mxu0 %v1406
          %1427 = vmatprep.subr.bf16.mxu0 0
          %1428 = vmatpush1.bf16.msra.mxu0 %v1407
          %1429 = vmatprep.subr.bf16.mxu0 0
          %1430 = vmatpush1.bf16.msra.mxu0 %v1408
          %1431 = vmatprep.subr.bf16.mxu0 0
          %1432 = vmatpush1.bf16.msra.mxu0 %v1409
          %1433 = vmatprep.subr.bf16.mxu0 0
          %1434 = vmatpush1.bf16.msra.mxu0 %v1410
          %1435 = vmatprep.subr.bf16.mxu0 0
          %1436 = vmatpush1.bf16.msra.mxu0 0
          %1437 = vmatprep.subr.bf16.mxu0 0
          %1438 = vmatpush1.bf16.msra.mxu0 0
          %1439 = vmatprep.subr.bf16.mxu0 0
          %1440 = vmatpush1.bf16.msra.mxu0 0
          %1441 = vmatprep.subr.bf16.mxu0 0
          %1442 = vmatpush1.bf16.msra.mxu0 0
          %1443 = vmatprep.subr.bf16.mxu0 0
          %1444 = vmatpush1.bf16.msra.mxu0 0
          %1445 = vmatprep.subr.bf16.mxu0 0
          %1446 = vmatpush1.bf16.msra.mxu0 0
          %1447 = vmatprep.subr.bf16.mxu0 0
          %1448 = vmatpush1.bf16.msra.mxu0 0
          %1449 = vmatprep.subr.bf16.mxu0 0
          %1450 = vmatpush1.bf16.msra.mxu0 0
          %1451 = vmatprep.mubr.bf16.mxu0 0
          %1452 = vmatmul.mubr.bf16.gmra.mrb[0].mxu0 %v1347
          %v1453 = vpop.f32.mrb[0].mxu0
          %v1454 = vadd.f32 %v1369, %v1453
          %v1455 = vpop.f32.mrb[0].mxu0
          %v1456 = vpop.f32.mrb[0].mxu0
          %v1457 = vpop.f32.mrb[0].mxu0
          %1458 = vdwg.mxu0
          %1459 = vst [vmem:[%s430] sm:$0xff] %v1454
        $region64: #{tpu_custom_call.1} parent=51 // pred_fallthru
          _
        %s1460 = sand.u32 %s269, 1
        %s1461 = scalar_lea.sflag [#allocation7], %s1460
        %s1462 = sand.u32 %s269, 1
        %s1463 = smul.addr %s1462, 8
        %s1464 = scalar_lea.vmem [#allocation6], %s1463
        // Predicated region
        $region65: #{tpu_custom_call.1} parent=51 // pred_check
          %p1465 = pneg %p279
        $region66: #{tpu_custom_call.1} parent=51 // pred_check_branch
          %1467 = sbr.rel (%p1465) target = $region68
        $region67: #{tpu_custom_call.1} parent=51 // pred_region
          %s1469 = ssub.s32 128, 128
          %1470 = vsyncadd %s1461, %s1469
          %s1471 = smul.addr %s38, 128
          %s1472 = scalar_lea.hbm %s10, %s1471
          %s1474 = sshll.u32 %s1464, 4
          %s1475 = int_to_ptr.vmem [resolvable:$true] %s1474
          %1477 = dma.vmem_to_hbm [thread:$0]  %s1475, 128, %s1472, %s1461
        $region68: #{tpu_custom_call.1} parent=51 // pred_fallthru
          _
      $region52: #{tpu_custom_call.1} parent=5 // pred_fallthru
        _
      %p1478 = scmp.le.s32.totalorder 2, %s29
      // Predicated region
      $region69: #{tpu_custom_call.1} parent=5 // pred_check
        %p1479 = pneg %p1478
      $region70: #{tpu_custom_call.1} parent=5 // pred_check_branch
        %1481 = sbr.rel (%p1479) target = $region72
      $region71: #{tpu_custom_call.1} parent=5 // pred_region
        %s1482 = ssub.s32 %s29, 2
        // Predicated region
        $region73: #{tpu_custom_call.1} parent=71 // pred_check
          %p1483 = pneg %p285
        $region74: #{tpu_custom_call.1} parent=71 // pred_check_branch
          %1485 = sbr.rel (%p1483) target = $region76
        $region75: #{tpu_custom_call.1} parent=71 // pred_region
          %s1486 = sand.u32 %s270, 1
          %s1487 = scalar_lea.sflag [#allocation7], %s1486
          %s1488 = sand.u32 %s270, 1
          %s1489 = smul.addr %s1488, 8
          %s1490 = scalar_lea.vmem [#allocation6], %s1489
          %1491 = dma.done %s1487, 128
        $region76: #{tpu_custom_call.1} parent=71 // pred_fallthru
          _
      $region72: #{tpu_custom_call.1} parent=5 // pred_fallthru
        _
    $region6: #{tpu_custom_call.1} parent=1 // loop_footer
      %s33 = sadd.s32 1, %s29
    $region7: #{tpu_custom_call.1} parent=1 // loop_footer_branch
      %28 = sbr.rel target = $region3
    $region8: #{tpu_custom_call.1} parent=1 // loop_exit
      _
    %1492 = vsyncpa [#allocation7], 1
    %s1493 = scalar_lea.sflag [#allocation7], 1
    %1494 = vsyncpa %s1493, 1

</llo_original>
